<compile_context>
chip_gen: v7x
topology: tpu7x:2x2x1
jax: 0.10.0
libtpu: 0.0.40
codegen_flags: <defaults>
</compile_context>

<pallas_src>
import functools

import jax
import jax.numpy as jnp
from jax import lax
from jax.experimental import pallas as pl
from jax.experimental.pallas import tpu as pltpu


# --------------------------------------------------------------------------
# helpers
# --------------------------------------------------------------------------
def _round_up(x, m):
    return ((x + m - 1) // m) * m


def _pad_to(x, shape):
    return jnp.pad(x, [(0, t - s) for s, t in zip(x.shape, shape)])


def _pick_batch_block(B, L, target_rows=256, max_rows=512):
    """Per-step batch block Bt.  Prefer >=2 grid blocks along the parallel batch
    axis (v7x has 2 TensorCores) and keep Bt*L <= max_rows so the f32
    temporaries (energy/attn are Bt*L*S_p) stay VMEM friendly on v7x."""
    cands = [bt for bt in range(1, B + 1) if B % bt == 0 and bt * L <= max_rows]
    if not cands:
        cands = [1]
    multi = [bt for bt in cands if B // bt >= 2]
    pool = multi if multi else cands
    for bt in pool:                      # ascending: smallest Bt hitting target
        if bt * L >= target_rows:
            return bt
    return pool[-1]


def _pick_vocab_tile(v_pad):
    for tv in (1024, 512, 256, 128):
        if tv <= v_pad and v_pad % tv == 0:
            return tv
    return v_pad


def _vmem_limit_bytes():
    """~75% of physical VMEM, capped at 100 MiB: ~96 MiB on v5e/v6e (128 MiB
    physical), ~48 MiB on v7x (64 MiB physical)."""
    cap = 64 * 1024 * 1024
    try:
        cap = int(getattr(pltpu.get_tpu_info(), "vmem_capacity_bytes", cap)) or cap
    except Exception:
        pass
    return max(32 * 1024 * 1024, min(100 * 1024 * 1024, (cap * 3) // 4))


# --------------------------------------------------------------------------
# Pallas kernels
# --------------------------------------------------------------------------
def _decoder_layers_kernel(emb_ref, enc_c_ref, enc_k_ref, mask_ref,
                           convw_ref, convb_ref,
                           ah2e_w_ref, ah2e_b_ref,
                           ae2h_w_ref, ae2h_b_ref,
                           h2e_w_ref, h2e_b_ref,
                           x_ref, attn_ref,
                           im2col_ref,
                           *, pad_val, apply_mask):
    layer = pl.program_id(1)
    last_layer = pl.num_programs(1) - 1
    Bt, L, E_p = x_ref.shape
    KE, H_pp = convw_ref.shape
    K = KE // E_p
    H2_p = H_pp // 2
    M = Bt * L
    bf16, f32 = jnp.bfloat16, jnp.float32

    # Layer 0: seed the VMEM-resident activation with the embeddings and fill
    # the constant causal-pad regions of the im2col operand (identical for every
    # layer; the scratch persists across the layer axis).
    @pl.when(layer == 0)
    def _():
        x_ref[...] = emb_ref[...]
        for k in range(K - 1):
            npad = K - 1 - k
            # NOTE: pad_val also lands in padded channel columns (>= E); this is
            # harmless because the conv-weight rows for those channels are zero.
            im2col_ref[:, :npad, k * E_p:(k + 1) * E_p] = jnp.full(
                (Bt, npad, E_p), pad_val, bf16)

    x = x_ref[...]                                           # (Bt, L, E_p) f32
    x_b = x.astype(bf16)                                     # cast once

    # im2col: lane-concatenate the K causal shifts of x at lane offsets k*E_p.
    for k in range(K):
        npad = K - 1 - k
        im2col_ref[:, npad:, k * E_p:(k + 1) * E_p] = x_b[:, :L - npad, :]

    # Conv1d as ONE MXU matmul with a K*E_p-deep contraction.
    conved = (jnp.dot(im2col_ref[...].reshape(M, KE), convw_ref[...],
                      preferred_element_type=f32)
              + convb_ref[...])                              # (M, H_pp)

    # GLU over channels (padded layout [a | a_pad | g | g_pad], pads stay 0).
    a = conved[:, :H2_p]
    g = conved[:, H2_p:]
    glu = a * pl.reciprocal(1.0 + jnp.exp(-g), approx=True)  # (M, H2_p)

    # Attention.
    conved_emb = (jnp.dot(glu.astype(bf16), ah2e_w_ref[...],
                          preferred_element_type=f32) + ah2e_b_ref[...])
    combined = conved_emb.reshape(Bt, L, E_p) + x            # (Bt, L, E_p)
    energy = jnp.einsum("ble,bes->bls", combined.astype(bf16), enc_c_ref[...],
                        preferred_element_type=f32)          # (Bt, L, S_p)
    if apply_mask:                                           # static
        energy = energy + mask_ref[...]                      # additive (1, S_p) bias
    energy = energy - jnp.max(energy, axis=-1, keepdims=True)
    p = jnp.exp(energy)
    attn = p * pl.reciprocal(jnp.sum(p, axis=-1, keepdims=True), approx=True)
    attended = jnp.einsum("bls,bse->ble", attn.astype(bf16), enc_k_ref[...],
                          preferred_element_type=f32)        # (Bt, L, E_p)
    attended = (jnp.dot(attended.reshape(M, E_p).astype(bf16), ae2h_w_ref[...],
                        preferred_element_type=f32) + ae2h_b_ref[...])
    conved2 = glu + attended                                 # (M, H2_p)

    # hid2emb + residual; x stays resident in VMEM across the layer axis.
    conved3 = (jnp.dot(conved2.astype(bf16), h2e_w_ref[...],
                       preferred_element_type=f32) + h2e_b_ref[...])
    x_ref[...] = conved3.reshape(Bt, L, E_p) + x

    # Only the final layer's attention is returned -> store only then
    # (saves a (Bt, L, S_p) vector store per non-final layer).
    @pl.when(layer == last_layer)
    def _():
        attn_ref[...] = attn.astype(attn_ref.dtype)


def _fc_out_kernel(x_ref, w_ref, b_ref, out_ref):
    out_ref[...] = (jnp.dot(x_ref[...].astype(jnp.bfloat16), w_ref[...],
                            preferred_element_type=jnp.float32)
                    + b_ref[...]).astype(out_ref.dtype)


# --------------------------------------------------------------------------
# Pallas wrappers
# --------------------------------------------------------------------------
def _decoder_layers(emb, enc_c, enc_k, mask, convw, convb,
                    ah2e_w, ah2e_b, ae2h_w, ae2h_b, h2e_w, h2e_b,
                    *, pad_val, apply_mask):
    B, L, E_p = emb.shape
    NL, KE, H_pp = convw.shape
    S_p = enc_c.shape[-1]
    H2_p = H_pp // 2
    Bt = _pick_batch_block(B, L)
    grid = (B // Bt, NL)                       # layer axis last ("arbitrary")

    bmap = lambda bb, l: (bb, 0, 0)
    wmap = lambda bb, l: (0, 0)

    kernel = functools.partial(_decoder_layers_kernel,
                               pad_val=pad_val, apply_mask=apply_mask)
    return pl.pallas_call(
        kernel,
        out_shape=(jax.ShapeDtypeStruct((B, L, E_p), jnp.float32),
                   jax.ShapeDtypeStruct((B, L, S_p), jnp.float32)),
        grid=grid,
        in_specs=[
            pl.BlockSpec((Bt, L, E_p), bmap),                        # embeddings
            pl.BlockSpec((Bt, E_p, S_p), bmap),                      # enc_conved
            pl.BlockSpec((Bt, S_p, E_p), bmap),                      # enc_combined^T
            pl.BlockSpec((1, S_p), wmap),                            # softmax src mask
            pl.BlockSpec((None, KE, H_pp), lambda bb, l: (l, 0, 0)), # conv w (im2col)
            pl.BlockSpec((None, 1, H_pp), lambda bb, l: (l, 0, 0)),  # conv b
            pl.BlockSpec((H2_p, E_p), wmap),                         # attn_hid2emb^T
            pl.BlockSpec((1, E_p), wmap),
            pl.BlockSpec((E_p, H2_p), wmap),                         # attn_emb2hid^T
            pl.BlockSpec((1, H2_p), wmap),
            pl.BlockSpec((H2_p, E_p), wmap),                         # hid2emb^T
            pl.BlockSpec((1, E_p), wmap),
        ],
        out_specs=(pl.BlockSpec((Bt, L, E_p), bmap),
                   pl.BlockSpec((Bt, L, S_p), bmap)),
        scratch_shapes=[pltpu.VMEM((Bt, L, KE), jnp.bfloat16)],      # im2col operand
        compiler_params=pltpu.CompilerParams(
            dimension_semantics=("parallel", "arbitrary"),
            vmem_limit_bytes=_vmem_limit_bytes()),
    )(emb, enc_c, enc_k, mask, convw, convb, ah2e_w, ah2e_b,
      ae2h_w, ae2h_b, h2e_w, h2e_b)


def _fc_out(x2d, w_p, b_p):
    M, E_p = x2d.shape
    V_p = w_p.shape[1]
    M_p = _round_up(M, 8)
    TM = M_p if M_p <= 512 else 256
    M_p = _round_up(M_p, TM)
    if M_p != M:
        x2d = _pad_to(x2d, (M_p, E_p))
    TV = _pick_vocab_tile(V_p)
    # Vocab on the SLOW grid axis -> each (E_p, TV) weight block streams from
    # HBM exactly once; only the (much smaller) bf16 activation is re-streamed.
    out = pl.pallas_call(
        _fc_out_kernel,
        out_shape=jax.ShapeDtypeStruct((M_p, V_p), jnp.float32),
        grid=(V_p // TV, M_p // TM),
        in_specs=[pl.BlockSpec((TM, E_p), lambda j, i: (i, 0)),
                  pl.BlockSpec((E_p, TV), lambda j, i: (0, j)),
                  pl.BlockSpec((1, TV), lambda j, i: (0, j))],
        out_specs=pl.BlockSpec((TM, TV), lambda j, i: (i, j)),
        compiler_params=pltpu.CompilerParams(
            dimension_semantics=("parallel", "parallel"),
            vmem_limit_bytes=_vmem_limit_bytes()),
    )(x2d, w_p, b_p)
    return out[:M]


def cnn_decoder_forward(targets, encoder_conved, encoder_combined,
                        raw, kernel_size, trg_pad_idx):
    B, L = targets.shape
    V, E = raw["embed"].shape
    S = int(encoder_conved.shape[-1])
    K = kernel_size
    H2 = raw["attn_emb2hid_w"].shape[0]

    E_p = _round_up(E, 128)
    H2_p = _round_up(H2, 128)
    H_pp = 2 * H2_p
    S_p = _round_up(S, 128)
    V_p = _round_up(V, 128)
    bf16, f32 = jnp.bfloat16, jnp.float32

    # Embedding lookup (gather) done in plain-JAX glue; pad channels to 128.
    emb = jnp.take(raw["embed"], targets, axis=0)                   # (B, L, E)
    emb_p = _pad_to(emb, (B, L, E_p)).astype(f32)

    enc_c_p = _pad_to(encoder_conved, (B, E_p, S_p)).astype(bf16)
    enc_k_p = _pad_to(jnp.transpose(encoder_combined, (0, 2, 1)),
                      (B, S_p, E_p)).astype(bf16)

    # Additive softmax source mask (hoisted out of the kernel).
    col = jnp.arange(S_p, dtype=jnp.int32)[None, :]
    src_mask = jnp.where(col < S, 0.0, -1e30).astype(f32)           # (1, S_p)

    # Per-layer conv weights in im2col layout (K*E_p, 2*H2_p).  GLU halves sit
    # at lane offsets 0 (a) and H2_p (g) so the padded channels stay zero.
    convw_list, convb_list = [], []
    for (cw, cb) in raw["convs"]:
        w_t = jnp.transpose(cw, (2, 1, 0))                          # (K, E, H)
        w_p = jnp.zeros((K, E_p, H_pp), f32)
        w_p = w_p.at[:, :E, :H2].set(w_t[:, :, :H2])
        w_p = w_p.at[:, :E, H2_p:H2_p + H2].set(w_t[:, :, H2:])
        b_p = jnp.zeros((1, H_pp), f32)
        b_p = b_p.at[0, :H2].set(cb[:H2])
        b_p = b_p.at[0, H2_p:H2_p + H2].set(cb[H2:])
        convw_list.append(w_p.reshape(K * E_p, H_pp))
        convb_list.append(b_p)
    convw = jnp.stack(convw_list).astype(bf16)                      # (NL, K*E_p, H_pp)
    convb = jnp.stack(convb_list).astype(f32)                       # (NL, 1, H_pp)

    ah2e_w = _pad_to(raw["attn_hid2emb_w"].T, (H2_p, E_p)).astype(bf16)
    ah2e_b = _pad_to(raw["attn_hid2emb_b"][None, :], (1, E_p)).astype(f32)
    ae2h_w = _pad_to(raw["attn_emb2hid_w"].T, (E_p, H2_p)).astype(bf16)
    ae2h_b = _pad_to(raw["attn_emb2hid_b"][None, :], (1, H2_p)).astype(f32)
    h2e_w = _pad_to(raw["hid2emb_w"].T, (H2_p, E_p)).astype(bf16)
    h2e_b = _pad_to(raw["hid2emb_b"][None, :], (1, E_p)).astype(f32)

    x_out, attn_p = _decoder_layers(
        emb_p, enc_c_p, enc_k_p, src_mask, convw, convb,
        ah2e_w, ah2e_b, ae2h_w, ae2h_b, h2e_w, h2e_b,
        pad_val=float(trg_pad_idx), apply_mask=(S < S_p))

    fc_w = _pad_to(raw["fc_out_w"].T, (E_p, V_p)).astype(bf16)
    fc_b = _pad_to(raw["fc_out_b"][None, :], (1, V_p)).astype(f32)
    logits = _fc_out(x_out.reshape(B * L, E_p).astype(bf16), fc_w, fc_b)
    output = logits.reshape(B, L, V_p)[:, :, :V]
    attention = attn_p[:, :, :S]
    return output, attention
    # TODO(synk): self.emb2hid is defined in __init__ but unused in forward.


# --------------------------------------------------------------------------
# Pure-JAX reference (mirrors the PyTorch NCL layout exactly)
# --------------------------------------------------------------------------
def reference_forward(targets, encoder_conved, encoder_combined,
                      raw, K, pad_idx):
    emb = jnp.take(raw["embed"], targets, axis=0)                   # (B, L, E)
    conv_inp = jnp.transpose(emb, (0, 2, 1))                        # (B, E, L)
    B, E, L = conv_inp.shape
    attention = None
    for (w, bcv) in raw["convs"]:
        padding = jnp.full((B, E, K - 1), float(pad_idx), conv_inp.dtype)
        padded = jnp.concatenate([padding, conv_inp], axis=-1)
        conved = lax.conv_general_dilated(
            padded, w, window_strides=(1,), padding="VALID",
            dimension_numbers=("NCH", "OIH", "NCH")) + bcv[None, :, None]
        H = conved.shape[1]
        a = conved[:, :H // 2, :]
        g = conved[:, H // 2:, :]
        conved = a * jax.nn.sigmoid(g)                              # GLU
        conved_emb = (jnp.einsum("bhl,eh->bel", conved, raw["attn_hid2emb_w"])
                      + raw["attn_hid2emb_b"][None, :, None])
        combined = conved_emb + conv_inp
        energy = jnp.einsum("bel,bes->bls", combined, encoder_conved)
        attention = jax.nn.softmax(energy, axis=2)
        attended = jnp.einsum("bls,bes->ble", attention, encoder_combined)
        attended = (jnp.einsum("ble,he->blh", attended, raw["attn_emb2hid_w"])
                    + raw["attn_emb2hid_b"])
        conved = conved + jnp.transpose(attended, (0, 2, 1))
        conved = (jnp.einsum("bhl,eh->bel", conved, raw["hid2emb_w"])
                  + raw["hid2emb_b"][None, :, None])
        conved = conved + conv_inp
        conv_inp = conved
    output = (jnp.einsum("bel,ve->blv", conv_inp, raw["fc_out_w"])
              + raw["fc_out_b"])
    return output, attention


# --------------------------------------------------------------------------
if __name__ == "__main__":
    B, L, S = 2, 8, 8            # batch, trg_len, src_len
    V, E, H, K = 32, 16, 32, 3   # out_dim (vocab), emb_dim, hid_dim, kernel
    NUM_LAYERS = 2
    TRG_PAD_IDX = 1
    H2 = H // 2

    key = jax.random.PRNGKey(0)
    keys = jax.random.split(key, 20)

    def nrm(k, shape):
        return jax.random.normal(k, shape, jnp.float32) * 0.1

    raw = {
        "embed": nrm(keys[0], (V, E)),
        "attn_hid2emb_w": nrm(keys[1], (E, H2)),   # nn.Linear(H/2, E) weight
        "attn_hid2emb_b": nrm(keys[2], (E,)),
        "attn_emb2hid_w": nrm(keys[3], (H2, E)),   # nn.Linear(E, H/2) weight
        "attn_emb2hid_b": nrm(keys[4], (H2,)),
        "hid2emb_w": nrm(keys[5], (E, H2)),        # nn.Linear(H/2, E) weight
        "hid2emb_b": nrm(keys[6], (E,)),
        "fc_out_w": nrm(keys[7], (V, E)),          # nn.Linear(E, V) weight
        "fc_out_b": nrm(keys[8], (V,)),
        "convs": [(nrm(keys[9 + 2 * i], (H, E, K)),   # Conv1d weight (O, I, K)
                   nrm(keys[10 + 2 * i], (H,)))
                  for i in range(NUM_LAYERS)],
    }

    targets = jax.random.randint(keys[15], (B, L), 0, V)
    encoder_conved = nrm(keys[16], (B, E, S))      # PyTorch layout (B, E, S)
    encoder_combined = nrm(keys[17], (B, E, S))

    out_k, attn_k = cnn_decoder_forward(
        targets, encoder_conved, encoder_combined, raw, K, TRG_PAD_IDX)
    out_k = jax.block_until_ready(out_k)
    attn_k = jax.block_until_ready(attn_k)

    out_r, attn_r = reference_forward(
        targets, encoder_conved, encoder_combined, raw, K, TRG_PAD_IDX)

    assert out_k.shape == (B, L, V) and attn_k.shape == (B, L, S)
    # bf16 MXU matmuls + EUP approx reciprocal -> slightly looser tolerance
    # than a pure-f32 comparison.
    ok_out = bool(jnp.allclose(out_k, out_r, rtol=5e-2, atol=1e-2))
    ok_attn = bool(jnp.allclose(attn_k, attn_r, rtol=5e-2, atol=1e-2))
    if not (ok_out and ok_attn):
        raise AssertionError(
            f"mismatch: out max err {float(jnp.max(jnp.abs(out_k - out_r)))}, "
            f"attn max err {float(jnp.max(jnp.abs(attn_k - attn_r)))}")
    print("KERNEL_OK")
</pallas_src>

<mosaic_0001>
module attributes {stable_mosaic.version = 11 : i64} {
  func.func @_decoder_layers_kernel(%arg0: i32, %arg1: i32, %arg2: memref<1x8x128xf32, #tpu.memory_space<vmem>>, %arg3: memref<1x128x128xbf16, #tpu.memory_space<vmem>>, %arg4: memref<1x128x128xbf16, #tpu.memory_space<vmem>>, %arg5: memref<1x128xf32, #tpu.memory_space<vmem>>, %arg6: memref<1x384x256xbf16, #tpu.memory_space<vmem>>, %arg7: memref<1x1x256xf32, #tpu.memory_space<vmem>>, %arg8: memref<128x128xbf16, #tpu.memory_space<vmem>>, %arg9: memref<1x128xf32, #tpu.memory_space<vmem>>, %arg10: memref<128x128xbf16, #tpu.memory_space<vmem>>, %arg11: memref<1x128xf32, #tpu.memory_space<vmem>>, %arg12: memref<128x128xbf16, #tpu.memory_space<vmem>>, %arg13: memref<1x128xf32, #tpu.memory_space<vmem>>, %arg14: memref<1x8x128xf32, #tpu.memory_space<vmem>>, %arg15: memref<1x8x128xf32, #tpu.memory_space<vmem>>, %arg16: memref<1x8x384xbf16, #tpu.memory_space<vmem>>) attributes {dimension_semantics = [#tpu.dimension_semantics<parallel>, #tpu.dimension_semantics<arbitrary>], iteration_bounds = array<i64: 2, 2>, scalar_prefetch = 0 : i64, scratch_operands = 1 : i64, tpu.core_type = #tpu.core_type<tc>, window_params = [{transform_indices = @transform_0, window_bounds = array<i64: 1, 8, 128>}, {transform_indices = @transform_1, window_bounds = array<i64: 1, 128, 128>}, {transform_indices = @transform_2, window_bounds = array<i64: 1, 128, 128>}, {pipeline_mode = #tpu.pipeline_mode<synchronous>, transform_indices = @transform_3, window_bounds = array<i64: 1, 128>}, {transform_indices = @transform_4, window_bounds = array<i64: 1, 384, 256>}, {transform_indices = @transform_5, window_bounds = array<i64: 1, 1, 256>}, {pipeline_mode = #tpu.pipeline_mode<synchronous>, transform_indices = @transform_6, window_bounds = array<i64: 128, 128>}, {pipeline_mode = #tpu.pipeline_mode<synchronous>, transform_indices = @transform_7, window_bounds = array<i64: 1, 128>}, {pipeline_mode = #tpu.pipeline_mode<synchronous>, transform_indices = @transform_8, window_bounds = array<i64: 128, 128>}, {pipeline_mode = #tpu.pipeline_mode<synchronous>, transform_indices = @transform_9, window_bounds = array<i64: 1, 128>}, {pipeline_mode = #tpu.pipeline_mode<synchronous>, transform_indices = @transform_10, window_bounds = array<i64: 128, 128>}, {pipeline_mode = #tpu.pipeline_mode<synchronous>, transform_indices = @transform_11, window_bounds = array<i64: 1, 128>}, {transform_indices = @transform_12, window_bounds = array<i64: 1, 8, 128>}, {transform_indices = @transform_13, window_bounds = array<i64: 1, 8, 128>}]} {
    %c0_i32 = arith.constant 0 : i32
    %0 = arith.cmpi eq, %arg1, %c0_i32 : i32
    %1 = arith.extui %0 : i1 to i32
    %c0_i32_0 = arith.constant 0 : i32
    %2 = arith.cmpi ne, %1, %c0_i32_0 : i32
    scf.if %2 {
      %c0_50 = arith.constant 0 : index
      %c0_51 = arith.constant 0 : index
      %c0_52 = arith.constant 0 : index
      %76 = vector.load %arg2[%c0_50, %c0_51, %c0_52] : memref<1x8x128xf32, #tpu.memory_space<vmem>>, vector<1x8x128xf32>
      %c0_53 = arith.constant 0 : index
      %c0_54 = arith.constant 0 : index
      %c0_55 = arith.constant 0 : index
      %77 = vector.load %arg14[%c0_53, %c0_54, %c0_55] : memref<1x8x128xf32, #tpu.memory_space<vmem>>, vector<1x8x128xf32>
      tpu.vector_store %arg14[%c0_53, %c0_54, %c0_55], %76 {strides = array<i32>} : memref<1x8x128xf32, #tpu.memory_space<vmem>>, vector<1x8x128xf32>,
      %cst_56 = arith.constant 1.000000e+00 : bf16
      %78 = vector.broadcast %cst_56 : bf16 to vector<1x2x128xbf16>
      %c0_57 = arith.constant 0 : index
      %c0_58 = arith.constant 0 : index
      %c0_59 = arith.constant 0 : index
      %79 = vector.load %arg16[%c0_57, %c0_58, %c0_59] : memref<1x8x384xbf16, #tpu.memory_space<vmem>>, vector<1x2x128xbf16>
      tpu.vector_store %arg16[%c0_57, %c0_58, %c0_59], %78 {strides = array<i32>} : memref<1x8x384xbf16, #tpu.memory_space<vmem>>, vector<1x2x128xbf16>,
      %cst_60 = arith.constant 1.000000e+00 : bf16
      %80 = vector.broadcast %cst_60 : bf16 to vector<1x1x128xbf16>
      %c0_61 = arith.constant 0 : index
      %c0_62 = arith.constant 0 : index
      %c128_63 = arith.constant 128 : index
      %81 = vector.load %arg16[%c0_61, %c0_62, %c128_63] : memref<1x8x384xbf16, #tpu.memory_space<vmem>>, vector<1x1x128xbf16>
      tpu.vector_store %arg16[%c0_61, %c0_62, %c128_63], %80 {strides = array<i32>} : memref<1x8x384xbf16, #tpu.memory_space<vmem>>, vector<1x1x128xbf16>,
    } else {
    }
    %c0 = arith.constant 0 : index
    %c0_1 = arith.constant 0 : index
    %c0_2 = arith.constant 0 : index
    %3 = vector.load %arg14[%c0, %c0_1, %c0_2] : memref<1x8x128xf32, #tpu.memory_space<vmem>>, vector<1x8x128xf32>
    %4 = arith.truncf %3 : vector<1x8x128xf32> to vector<1x8x128xbf16>
    %5 = vector.extract_strided_slice %4 {offsets = [0, 0, 0], sizes = [1, 6, 128], strides = [1, 1, 1]} : vector<1x8x128xbf16> to vector<1x6x128xbf16>
    %c0_3 = arith.constant 0 : index
    %c2 = arith.constant 2 : index
    %c0_4 = arith.constant 0 : index
    %6 = vector.load %arg16[%c0_3, %c2, %c0_4] : memref<1x8x384xbf16, #tpu.memory_space<vmem>>, vector<1x6x128xbf16>
    tpu.vector_store %arg16[%c0_3, %c2, %c0_4], %5 {strides = array<i32>} : memref<1x8x384xbf16, #tpu.memory_space<vmem>>, vector<1x6x128xbf16>,
    %7 = vector.extract_strided_slice %4 {offsets = [0, 0, 0], sizes = [1, 7, 128], strides = [1, 1, 1]} : vector<1x8x128xbf16> to vector<1x7x128xbf16>
    %c0_5 = arith.constant 0 : index
    %c1 = arith.constant 1 : index
    %c128 = arith.constant 128 : index
    %8 = vector.load %arg16[%c0_5, %c1, %c128] : memref<1x8x384xbf16, #tpu.memory_space<vmem>>, vector<1x7x128xbf16>
    tpu.vector_store %arg16[%c0_5, %c1, %c128], %7 {strides = array<i32>} : memref<1x8x384xbf16, #tpu.memory_space<vmem>>, vector<1x7x128xbf16>,
    %c0_6 = arith.constant 0 : index
    %c0_7 = arith.constant 0 : index
    %c256 = arith.constant 256 : index
    %9 = vector.load %arg16[%c0_6, %c0_7, %c256] : memref<1x8x384xbf16, #tpu.memory_space<vmem>>, vector<1x8x128xbf16>
    tpu.vector_store %arg16[%c0_6, %c0_7, %c256], %4 {strides = array<i32>} : memref<1x8x384xbf16, #tpu.memory_space<vmem>>, vector<1x8x128xbf16>,
    %c0_8 = arith.constant 0 : index
    %c0_9 = arith.constant 0 : index
    %c0_10 = arith.constant 0 : index
    %10 = vector.load %arg16[%c0_8, %c0_9, %c0_10] : memref<1x8x384xbf16, #tpu.memory_space<vmem>>, vector<1x8x384xbf16>
    %11 = vector.shape_cast %10 : vector<1x8x384xbf16> to vector<8x384xbf16>
    %c0_11 = arith.constant 0 : index
    %c0_12 = arith.constant 0 : index
    %c0_13 = arith.constant 0 : index
    %12 = vector.load %arg6[%c0_11, %c0_12, %c0_13] : memref<1x384x256xbf16, #tpu.memory_space<vmem>>, vector<1x384x256xbf16>
    %13 = vector.shape_cast %12 : vector<1x384x256xbf16> to vector<384x256xbf16>
    %cst = arith.constant dense<0.000000e+00> : vector<8x256xf32>
    %14 = tpu.matmul %11, %13, %cst {dimension_numbers = #tpu.dot_dimension_numbers<[1], [0], [0], [1], [0, 0, 1, 1], [], []>} : vector<8x384xbf16>, vector<384x256xbf16>, vector<8x256xf32> -> vector<8x256xf32>
    %c0_14 = arith.constant 0 : index
    %c0_15 = arith.constant 0 : index
    %c0_16 = arith.constant 0 : index
    %15 = vector.load %arg7[%c0_14, %c0_15, %c0_16] : memref<1x1x256xf32, #tpu.memory_space<vmem>>, vector<1x1x256xf32>
    %16 = vector.shape_cast %15 : vector<1x1x256xf32> to vector<1x256xf32>
    %17 = vector.broadcast %16 : vector<1x256xf32> to vector<8x256xf32>
    %18 = arith.addf %14, %17 : vector<8x256xf32>
    %19 = vector.extract_strided_slice %18 {offsets = [0, 0], sizes = [8, 128], strides = [1, 1]} : vector<8x256xf32> to vector<8x128xf32>
    %20 = vector.extract_strided_slice %18 {offsets = [0, 128], sizes = [8, 128], strides = [1, 1]} : vector<8x256xf32> to vector<8x128xf32>
    %cst_17 = arith.constant 0.000000e+00 : f32
    %21 = vector.broadcast %cst_17 : f32 to vector<8x128xf32>
    %22 = arith.subf %21, %20 : vector<8x128xf32>
    %23 = math.exp %22 : vector<8x128xf32>
    %cst_18 = arith.constant 1.000000e+00 : f32
    %24 = vector.broadcast %cst_18 : f32 to vector<8x128xf32>
    %25 = arith.addf %24, %23 : vector<8x128xf32>
    %26 = tpu.reciprocal %25 {approx = true} : vector<8x128xf32> -> vector<8x128xf32>
    %27 = arith.mulf %19, %26 : vector<8x128xf32>
    %28 = arith.truncf %27 : vector<8x128xf32> to vector<8x128xbf16>
    %c0_19 = arith.constant 0 : index
    %c0_20 = arith.constant 0 : index
    %29 = vector.load %arg8[%c0_19, %c0_20] : memref<128x128xbf16, #tpu.memory_space<vmem>>, vector<128x128xbf16>
    %cst_21 = arith.constant dense<0.000000e+00> : vector<8x128xf32>
    %30 = tpu.matmul %28, %29, %cst_21 {dimension_numbers = #tpu.dot_dimension_numbers<[1], [0], [0], [1], [0, 0, 1, 1], [], []>} : vector<8x128xbf16>, vector<128x128xbf16>, vector<8x128xf32> -> vector<8x128xf32>
    %c0_22 = arith.constant 0 : index
    %c0_23 = arith.constant 0 : index
    %31 = vector.load %arg9[%c0_22, %c0_23] : memref<1x128xf32, #tpu.memory_space<vmem>>, vector<1x128xf32>
    %32 = vector.broadcast %31 : vector<1x128xf32> to vector<8x128xf32>
    %33 = arith.addf %30, %32 : vector<8x128xf32>
    %34 = vector.shape_cast %33 : vector<8x128xf32> to vector<1x8x128xf32>
    %35 = arith.addf %34, %3 : vector<1x8x128xf32>
    %36 = arith.truncf %35 : vector<1x8x128xf32> to vector<1x8x128xbf16>
    %c0_24 = arith.constant 0 : index
    %c0_25 = arith.constant 0 : index
    %c0_26 = arith.constant 0 : index
    %37 = vector.load %arg3[%c0_24, %c0_25, %c0_26] : memref<1x128x128xbf16, #tpu.memory_space<vmem>>, vector<1x128x128xbf16>
    "tpu.trace_start"() <{level = 10 : i32, message = "ble,bes->bls"}> : () -> ()
    %cst_27 = arith.constant dense<0.000000e+00> : vector<1x8x128xf32>
    %38 = tpu.matmul %36, %37, %cst_27 {dimension_numbers = #tpu.dot_dimension_numbers<[2], [1], [1], [2], [0, 0, 0, 1, 1, 2], [0], [0]>} : vector<1x8x128xbf16>, vector<1x128x128xbf16>, vector<1x8x128xf32> -> vector<1x8x128xf32>
    "tpu.trace_stop"() : () -> ()
    %c0_28 = arith.constant 0 : index
    %c0_29 = arith.constant 0 : index
    %39 = vector.load %arg5[%c0_28, %c0_29] : memref<1x128xf32, #tpu.memory_space<vmem>>, vector<1x128xf32>
    %40 = vector.shape_cast %39 : vector<1x128xf32> to vector<1x1x128xf32>
    %41 = vector.broadcast %40 : vector<1x1x128xf32> to vector<1x8x128xf32>
    %42 = arith.addf %38, %41 : vector<1x8x128xf32>
    %cst_30 = arith.constant dense<0xFF800000> : vector<1x8xf32>
    %43 = vector.multi_reduction <maximumf>, %42, %cst_30 [2] : vector<1x8x128xf32> to vector<1x8xf32>
    %44 = vector.shape_cast %43 : vector<1x8xf32> to vector<1x8x1xf32>
    %45 = vector.broadcast %44 : vector<1x8x1xf32> to vector<1x8x128xf32>
    %46 = arith.subf %42, %45 : vector<1x8x128xf32>
    %47 = math.exp %46 : vector<1x8x128xf32>
    %cst_31 = arith.constant dense<0.000000e+00> : vector<1x8xf32>
    %48 = vector.multi_reduction <add>, %47, %cst_31 [2] : vector<1x8x128xf32> to vector<1x8xf32>
    %49 = vector.shape_cast %48 : vector<1x8xf32> to vector<1x8x1xf32>
    %50 = tpu.reciprocal %49 {approx = true} : vector<1x8x1xf32> -> vector<1x8x1xf32>
    %51 = vector.broadcast %50 : vector<1x8x1xf32> to vector<1x8x128xf32>
    %52 = arith.mulf %47, %51 : vector<1x8x128xf32>
    %53 = arith.truncf %52 : vector<1x8x128xf32> to vector<1x8x128xbf16>
    %c0_32 = arith.constant 0 : index
    %c0_33 = arith.constant 0 : index
    %c0_34 = arith.constant 0 : index
    %54 = vector.load %arg4[%c0_32, %c0_33, %c0_34] : memref<1x128x128xbf16, #tpu.memory_space<vmem>>, vector<1x128x128xbf16>
    "tpu.trace_start"() <{level = 10 : i32, message = "bls,bse->ble"}> : () -> ()
    %cst_35 = arith.constant dense<0.000000e+00> : vector<1x8x128xf32>
    %55 = tpu.matmul %53, %54, %cst_35 {dimension_numbers = #tpu.dot_dimension_numbers<[2], [1], [1], [2], [0, 0, 0, 1, 1, 2], [0], [0]>} : vector<1x8x128xbf16>, vector<1x128x128xbf16>, vector<1x8x128xf32> -> vector<1x8x128xf32>
    "tpu.trace_stop"() : () -> ()
    %56 = vector.shape_cast %55 : vector<1x8x128xf32> to vector<8x128xf32>
    %57 = arith.truncf %56 : vector<8x128xf32> to vector<8x128xbf16>
    %c0_36 = arith.constant 0 : index
    %c0_37 = arith.constant 0 : index
    %58 = vector.load %arg10[%c0_36, %c0_37] : memref<128x128xbf16, #tpu.memory_space<vmem>>, vector<128x128xbf16>
    %cst_38 = arith.constant dense<0.000000e+00> : vector<8x128xf32>
    %59 = tpu.matmul %57, %58, %cst_38 {dimension_numbers = #tpu.dot_dimension_numbers<[1], [0], [0], [1], [0, 0, 1, 1], [], []>} : vector<8x128xbf16>, vector<128x128xbf16>, vector<8x128xf32> -> vector<8x128xf32>
    %c0_39 = arith.constant 0 : index
    %c0_40 = arith.constant 0 : index
    %60 = vector.load %arg11[%c0_39, %c0_40] : memref<1x128xf32, #tpu.memory_space<vmem>>, vector<1x128xf32>
    %61 = vector.broadcast %60 : vector<1x128xf32> to vector<8x128xf32>
    %62 = arith.addf %59, %61 : vector<8x128xf32>
    %63 = arith.addf %27, %62 : vector<8x128xf32>
    %64 = arith.truncf %63 : vector<8x128xf32> to vector<8x128xbf16>
    %c0_41 = arith.constant 0 : index
    %c0_42 = arith.constant 0 : index
    %65 = vector.load %arg12[%c0_41, %c0_42] : memref<128x128xbf16, #tpu.memory_space<vmem>>, vector<128x128xbf16>
    %cst_43 = arith.constant dense<0.000000e+00> : vector<8x128xf32>
    %66 = tpu.matmul %64, %65, %cst_43 {dimension_numbers = #tpu.dot_dimension_numbers<[1], [0], [0], [1], [0, 0, 1, 1], [], []>} : vector<8x128xbf16>, vector<128x128xbf16>, vector<8x128xf32> -> vector<8x128xf32>
    %c0_44 = arith.constant 0 : index
    %c0_45 = arith.constant 0 : index
    %67 = vector.load %arg13[%c0_44, %c0_45] : memref<1x128xf32, #tpu.memory_space<vmem>>, vector<1x128xf32>
    %68 = vector.broadcast %67 : vector<1x128xf32> to vector<8x128xf32>
    %69 = arith.addf %66, %68 : vector<8x128xf32>
    %70 = vector.shape_cast %69 : vector<8x128xf32> to vector<1x8x128xf32>
    %71 = arith.addf %70, %3 : vector<1x8x128xf32>
    %c0_46 = arith.constant 0 : index
    %c0_47 = arith.constant 0 : index
    %c0_48 = arith.constant 0 : index
    %72 = vector.load %arg14[%c0_46, %c0_47, %c0_48] : memref<1x8x128xf32, #tpu.memory_space<vmem>>, vector<1x8x128xf32>
    tpu.vector_store %arg14[%c0_46, %c0_47, %c0_48], %71 {strides = array<i32>} : memref<1x8x128xf32, #tpu.memory_space<vmem>>, vector<1x8x128xf32>,
    %c1_i32 = arith.constant 1 : i32
    %73 = arith.cmpi eq, %arg1, %c1_i32 : i32
    %74 = arith.extui %73 : i1 to i32
    %c0_i32_49 = arith.constant 0 : i32
    %75 = arith.cmpi ne, %74, %c0_i32_49 : i32
    scf.if %75 {
      %c0_50 = arith.constant 0 : index
      %c0_51 = arith.constant 0 : index
      %c0_52 = arith.constant 0 : index
      %76 = vector.load %arg15[%c0_50, %c0_51, %c0_52] : memref<1x8x128xf32, #tpu.memory_space<vmem>>, vector<1x8x128xf32>
      tpu.vector_store %arg15[%c0_50, %c0_51, %c0_52], %52 {strides = array<i32>} : memref<1x8x128xf32, #tpu.memory_space<vmem>>, vector<1x8x128xf32>,
    } else {
    }
    return
  }
  func.func @transform_0(%arg0: i32, %arg1: i32) -> (i32, i32, i32) {
    %c0_i32 = arith.constant 0 : i32
    %c0_i32_0 = arith.constant 0 : i32
    %c0_i32_1 = arith.constant 0 : i32
    return %arg0, %c0_i32, %c0_i32_0 : i32, i32, i32
  }
  func.func @transform_1(%arg0: i32, %arg1: i32) -> (i32, i32, i32) {
    %c0_i32 = arith.constant 0 : i32
    %c0_i32_0 = arith.constant 0 : i32
    %c0_i32_1 = arith.constant 0 : i32
    return %arg0, %c0_i32, %c0_i32_0 : i32, i32, i32
  }
  func.func @transform_2(%arg0: i32, %arg1: i32) -> (i32, i32, i32) {
    %c0_i32 = arith.constant 0 : i32
    %c0_i32_0 = arith.constant 0 : i32
    %c0_i32_1 = arith.constant 0 : i32
    return %arg0, %c0_i32, %c0_i32_0 : i32, i32, i32
  }
  func.func @transform_3(%arg0: i32, %arg1: i32) -> (i32, i32) {
    %c0_i32 = arith.constant 0 : i32
    %c0_i32_0 = arith.constant 0 : i32
    %c0_i32_1 = arith.constant 0 : i32
    return %c0_i32, %c0_i32_0 : i32, i32
  }
  func.func @transform_4(%arg0: i32, %arg1: i32) -> (i32, i32, i32) {
    %c0_i32 = arith.constant 0 : i32
    %c0_i32_0 = arith.constant 0 : i32
    %c0_i32_1 = arith.constant 0 : i32
    return %arg1, %c0_i32, %c0_i32_0 : i32, i32, i32
  }
  func.func @transform_5(%arg0: i32, %arg1: i32) -> (i32, i32, i32) {
    %c0_i32 = arith.constant 0 : i32
    %c0_i32_0 = arith.constant 0 : i32
    %c0_i32_1 = arith.constant 0 : i32
    return %arg1, %c0_i32, %c0_i32_0 : i32, i32, i32
  }
  func.func @transform_6(%arg0: i32, %arg1: i32) -> (i32, i32) {
    %c0_i32 = arith.constant 0 : i32
    %c0_i32_0 = arith.constant 0 : i32
    %c0_i32_1 = arith.constant 0 : i32
    return %c0_i32, %c0_i32_0 : i32, i32
  }
  func.func @transform_7(%arg0: i32, %arg1: i32) -> (i32, i32) {
    %c0_i32 = arith.constant 0 : i32
    %c0_i32_0 = arith.constant 0 : i32
    %c0_i32_1 = arith.constant 0 : i32
    return %c0_i32, %c0_i32_0 : i32, i32
  }
  func.func @transform_8(%arg0: i32, %arg1: i32) -> (i32, i32) {
    %c0_i32 = arith.constant 0 : i32
    %c0_i32_0 = arith.constant 0 : i32
    %c0_i32_1 = arith.constant 0 : i32
    return %c0_i32, %c0_i32_0 : i32, i32
  }
  func.func @transform_9(%arg0: i32, %arg1: i32) -> (i32, i32) {
    %c0_i32 = arith.constant 0 : i32
    %c0_i32_0 = arith.constant 0 : i32
    %c0_i32_1 = arith.constant 0 : i32
    return %c0_i32, %c0_i32_0 : i32, i32
  }
  func.func @transform_10(%arg0: i32, %arg1: i32) -> (i32, i32) {
    %c0_i32 = arith.constant 0 : i32
    %c0_i32_0 = arith.constant 0 : i32
    %c0_i32_1 = arith.constant 0 : i32
    return %c0_i32, %c0_i32_0 : i32, i32
  }
  func.func @transform_11(%arg0: i32, %arg1: i32) -> (i32, i32) {
    %c0_i32 = arith.constant 0 : i32
    %c0_i32_0 = arith.constant 0 : i32
    %c0_i32_1 = arith.constant 0 : i32
    return %c0_i32, %c0_i32_0 : i32, i32
  }
  func.func @transform_12(%arg0: i32, %arg1: i32) -> (i32, i32, i32) {
    %c0_i32 = arith.constant 0 : i32
    %c0_i32_0 = arith.constant 0 : i32
    %c0_i32_1 = arith.constant 0 : i32
    return %arg0, %c0_i32, %c0_i32_0 : i32, i32, i32
  }
  func.func @transform_13(%arg0: i32, %arg1: i32) -> (i32, i32, i32) {
    %c0_i32 = arith.constant 0 : i32
    %c0_i32_0 = arith.constant 0 : i32
    %c0_i32_1 = arith.constant 0 : i32
    return %arg0, %c0_i32, %c0_i32_0 : i32, i32, i32
  }
}

</mosaic_0001>

<llo_original>
// kernel: tpu_custom_call.1
$region0: #{tpu_custom_call.1}
  #allocation0 [shape = 'u32[]', space=smem, size = 0x4, offset = 0x4, fixed_abs, tag = 'smem constant byte address 0x4 - core index']
  #allocation1 [shape = 'u32[144,128]{1,0:T(1,128)}', space=vmem, size = 0x12000, scoped, tag = 'internal scratch']
  #allocation2 [shape = 'bf16[1,8,384]{2,1,0:T(8,128)(2,1)}', space=vmem, size = 0x1800, scoped, tag = 'scratch operand']
  %s0 = inlined_call_operand.hbm [shape: f32[2,8,128], index: 0, kind: input, shape index: {}]
  %s1 = inlined_call_operand.hbm [shape: bf16[2,128,128], index: 1, kind: input, shape index: {}]
  %s2 = inlined_call_operand.hbm [shape: bf16[2,128,128], index: 2, kind: input, shape index: {}]
  %s3 = inlined_call_operand.vmem [shape: f32[1,128], index: 3, kind: input, shape index: {}]
  %s4 = inlined_call_operand.hbm [shape: bf16[2,384,256], index: 4, kind: input, shape index: {}]
  %s5 = inlined_call_operand.vmem [shape: f32[2,1,256], index: 5, kind: input, shape index: {}]
  %s6 = inlined_call_operand.hbm [shape: bf16[128,128], index: 6, kind: input, shape index: {}]
  %s7 = inlined_call_operand.vmem [shape: f32[1,128], index: 7, kind: input, shape index: {}]
  %s8 = inlined_call_operand.hbm [shape: bf16[128,128], index: 8, kind: input, shape index: {}]
  %s9 = inlined_call_operand.vmem [shape: f32[1,128], index: 9, kind: input, shape index: {}]
  %s10 = inlined_call_operand.hbm [shape: bf16[128,128], index: 10, kind: input, shape index: {}]
  %s11 = inlined_call_operand.vmem [shape: f32[1,128], index: 11, kind: input, shape index: {}]
  %s12 = inlined_call_operand.hbm [shape: f32[2,8,128], index: 12, kind: output, shape index: {0}]
  %s13 = inlined_call_operand.hbm [shape: f32[2,8,128], index: 13, kind: output, shape index: {1}]
  %14 = xla_tuple %s12, %s13
  %s15 = sld [smem:[#allocation0]]
  $region125: #{tpu_custom_call.1} parent=0
    _
  %s17 = ssub.s32 1, %s15
  %s18 = scalar_select 0, %s17, %s15
  $region1: #{tpu_custom_call.1} parent=0
    #allocation3 [shape = 'u8[8192]{0}', space=vmem, size = 0x2000, scoped, tag = 'input window, operand 0']
    #allocation4 [shape = 's32[2]{0}', space=sflag, size = 0x8, scoped, tag = 'scoped memory for tpu_custom_call.1']
    #allocation5 [shape = 's32[2]{0}', space=sflag, size = 0x8, scoped, tag = 'scoped memory for tpu_custom_call.1']
    #allocation6 [shape = 'u8[65536]{0}', space=vmem, size = 0x10000, scoped, tag = 'input window, operand 1']
    #allocation7 [shape = 's32[2]{0}', space=sflag, size = 0x8, scoped, tag = 'scoped memory for tpu_custom_call.1']
    #allocation8 [shape = 'u8[65536]{0}', space=vmem, size = 0x10000, scoped, tag = 'input window, operand 2']
    #allocation9 [shape = 'u8[393216]{0}', space=vmem, size = 0x60000, scoped, tag = 'input window, operand 4']
    #allocation10 [shape = 's32[2]{0}', space=sflag, size = 0x8, scoped, tag = 'scoped memory for tpu_custom_call.1']
    #allocation11 [shape = 'u8[32768]{0}', space=vmem, size = 0x8000, scoped, tag = 'input window, operand 6, single buffered']
    #allocation12 [shape = 'u8[32768]{0}', space=vmem, size = 0x8000, scoped, tag = 'input window, operand 8, single buffered']
    #allocation13 [shape = 's32[1]{0}', space=sflag, size = 0x4, scoped, tag = 'scoped memory for tpu_custom_call.1']
    #allocation14 [shape = 'u8[32768]{0}', space=vmem, size = 0x8000, scoped, tag = 'input window, operand 10, single buffered']
    #allocation15 [shape = 'u8[8192]{0}', space=vmem, size = 0x2000, scoped, tag = 'output window, operand 0']
    #allocation16 [shape = 'u8[8192]{0}', space=vmem, size = 0x2000, scoped, tag = 'output window, operand 1']
    #allocation17 [shape = 's32[2]{0}', space=sflag, size = 0x8, scoped, tag = 'scoped memory for tpu_custom_call.1']
    %19 = vsyncpa [#allocation4], 0
    %s20 = scalar_lea.sflag [#allocation4], 1
    %21 = vsyncpa %s20, 0
    %22 = vsyncpa [#allocation7], 0
    %s23 = scalar_lea.sflag [#allocation7], 1
    %24 = vsyncpa %s23, 0
    %25 = vsyncpa [#allocation10], 0
    %s26 = scalar_lea.sflag [#allocation10], 1
    %27 = vsyncpa %s26, 0
    %28 = vsyncpa [#allocation13], 0
    %29 = vsyncpa [#allocation5], 0
    %s30 = scalar_lea.sflag [#allocation5], 1
    %31 = vsyncpa %s30, 0
    %32 = vsyncpa [#allocation17], 0
    %s33 = scalar_lea.sflag [#allocation17], 1
    %34 = vsyncpa %s33, 0
    loop: start=0, step=1, limit=6
    $region2: #{tpu_custom_call.1} parent=1 // loop_pre_header
      _
    $region3: #{tpu_custom_call.1} parent=1 // loop_header
      %s36 = sphi 0, %s40
      %p37 = scmp.ge.s32.totalorder %s36, 6
      %s43 = sphi 0, %s55
      %s44 = sphi 0, %s51
      %s45 = sphi 0, %s43
      %s46 = sphi 0, %s44
      %s47 = sphi 0, %s45
      %s48 = sphi 0, %s46
      %s58 = sphi 0, %s60
      %s61 = sphi 0, %s58
      %s62 = sphi 0, %s61
      %s78 = sphi 0, %s62
      %s84 = sphi 0, %s86
      %s87 = sphi 0, %s84
      %s88 = sphi 0, %s87
      %s104 = sphi 0, %s88
      %s110 = sphi 0, %s112
      %s113 = sphi 0, %s110
      %s114 = sphi 0, %s113
      %s130 = sphi 0, %s114
      %s134 = sphi 0, %s134
      %s136 = sphi 0, %s134
      %s137 = sphi 0, %s136
      %s151 = sphi 0, %s137
      %s157 = sphi 0, %s159
      %s160 = sphi 0, %s157
      %s161 = sphi 0, %s160
      %s177 = sphi 0, %s161
      %s183 = sphi 0, %s185
      %s186 = sphi 0, %s183
      %s187 = sphi 0, %s186
      %s203 = sphi 0, %s187
      %s207 = sphi 0, %s207
      %s209 = sphi 0, %s207
      %s210 = sphi 0, %s209
      %s224 = sphi 0, %s210
      %s228 = sphi 0, %s228
      %s230 = sphi 0, %s228
      %s231 = sphi 0, %s230
      %s245 = sphi 0, %s231
      %s249 = sphi 0, %s249
      %s251 = sphi 0, %s249
      %s252 = sphi 0, %s251
      %s266 = sphi 0, %s252
      %s270 = sphi 0, %s270
      %s272 = sphi 0, %s270
      %s273 = sphi 0, %s272
      %s287 = sphi 0, %s273
      %s291 = sphi 0, %s291
      %s293 = sphi 0, %s291
      %s294 = sphi 0, %s293
      %s308 = sphi 0, %s294
      %s312 = sphi 0, %s312
      %s314 = sphi 0, %s312
      %s315 = sphi 0, %s314
      %s329 = sphi 0, %s315
      %s335 = sphi 0, %s337
      %s338 = sphi 0, %s335
      %s339 = sphi 0, %s338
      %s355 = sphi 0, %s339
      %s361 = sphi 0, %s363
      %s364 = sphi 0, %s361
      %s365 = sphi 0, %s364
      %s381 = sphi 0, %s365
    $region4: #{tpu_custom_call.1} parent=1 // loop_header_branch
      %39 = sbr.rel (%p37) target = $region8
    $region5: #{tpu_custom_call.1} parent=1 // loop_body
      %s41 = ssub.s32 %s36, 1
      %s42 = ssub.s32 %s36, 2
      %s49 = sadd.s32 1, %s44
      %p50 = scmp.ge.s32.totalorder %s49, 2
      %s51 = scalar_select %p50, 0, %s49
      %s52 = sadd.s32 1, %s43
      %s53 = scalar_select %p50, %s52, %s43
      %p54 = scmp.ge.s32.totalorder %s53, 2
      %s55 = scalar_select %p54, 0, %s53
      %s56 = ssub.s32 %s43, %s55
      %p57 = scmp.eq.s32.totalorder %s56, 0
      %s59 = sadd.s32 %s58, 1
      %s60 = scalar_select %p57, %s58, %s59
      %p63 = pneg %p57
      %p64 = scmp.eq.s32.totalorder %s36, 3
      %p65 = por %p63, %p64
      %p66 = scmp.ne.s32.totalorder %s58, %s61
      %p67 = scmp.eq.s32.totalorder %s36, 0
      %p68 = por %p66, %p67
      %p69 = scmp.ne.s32.totalorder %s58, %s61
      %p70 = scmp.eq.s32.totalorder %s41, 3
      %p71 = por %p69, %p70
      %p72 = scmp.ne.s32.totalorder %s61, %s62
      %p73 = scmp.eq.s32.totalorder %s41, 0
      %p74 = por %p72, %p73
      %p75 = scmp.ne.s32.totalorder %s61, %s62
      %p76 = scmp.eq.s32.totalorder %s42, 3
      %p77 = por %p75, %p76
      %p79 = scmp.ne.s32.totalorder %s62, %s78
      %p80 = scmp.eq.s32.totalorder %s42, 0
      %p81 = por %p79, %p80
      %s82 = ssub.s32 %s43, %s55
      %p83 = scmp.eq.s32.totalorder %s82, 0
      %s85 = sadd.s32 %s84, 1
      %s86 = scalar_select %p83, %s84, %s85
      %p89 = pneg %p83
      %p90 = scmp.eq.s32.totalorder %s36, 3
      %p91 = por %p89, %p90
      %p92 = scmp.ne.s32.totalorder %s84, %s87
      %p93 = scmp.eq.s32.totalorder %s36, 0
      %p94 = por %p92, %p93
      %p95 = scmp.ne.s32.totalorder %s84, %s87
      %p96 = scmp.eq.s32.totalorder %s41, 3
      %p97 = por %p95, %p96
      %p98 = scmp.ne.s32.totalorder %s87, %s88
      %p99 = scmp.eq.s32.totalorder %s41, 0
      %p100 = por %p98, %p99
      %p101 = scmp.ne.s32.totalorder %s87, %s88
      %p102 = scmp.eq.s32.totalorder %s42, 3
      %p103 = por %p101, %p102
      %p105 = scmp.ne.s32.totalorder %s88, %s104
      %p106 = scmp.eq.s32.totalorder %s42, 0
      %p107 = por %p105, %p106
      %s108 = ssub.s32 %s43, %s55
      %p109 = scmp.eq.s32.totalorder %s108, 0
      %s111 = sadd.s32 %s110, 1
      %s112 = scalar_select %p109, %s110, %s111
      %p115 = pneg %p109
      %p116 = scmp.eq.s32.totalorder %s36, 3
      %p117 = por %p115, %p116
      %p118 = scmp.ne.s32.totalorder %s110, %s113
      %p119 = scmp.eq.s32.totalorder %s36, 0
      %p120 = por %p118, %p119
      %p121 = scmp.ne.s32.totalorder %s110, %s113
      %p122 = scmp.eq.s32.totalorder %s41, 3
      %p123 = por %p121, %p122
      %p124 = scmp.ne.s32.totalorder %s113, %s114
      %p125 = scmp.eq.s32.totalorder %s41, 0
      %p126 = por %p124, %p125
      %p127 = scmp.ne.s32.totalorder %s113, %s114
      %p128 = scmp.eq.s32.totalorder %s42, 3
      %p129 = por %p127, %p128
      %p131 = scmp.ne.s32.totalorder %s114, %s130
      %p132 = scmp.eq.s32.totalorder %s42, 0
      %p133 = por %p131, %p132
      %s135 = sadd.s32 %s134, 1
      %p138 = scmp.eq.s32.totalorder %s36, 3
      %p139 = scmp.ne.s32.totalorder %s134, %s136
      %p140 = scmp.eq.s32.totalorder %s36, 0
      %p141 = por %p139, %p140
      %p142 = scmp.ne.s32.totalorder %s134, %s136
      %p143 = scmp.eq.s32.totalorder %s41, 3
      %p144 = por %p142, %p143
      %p145 = scmp.ne.s32.totalorder %s136, %s137
      %p146 = scmp.eq.s32.totalorder %s41, 0
      %p147 = por %p145, %p146
      %p148 = scmp.ne.s32.totalorder %s136, %s137
      %p149 = scmp.eq.s32.totalorder %s42, 3
      %p150 = por %p148, %p149
      %p152 = scmp.ne.s32.totalorder %s137, %s151
      %p153 = scmp.eq.s32.totalorder %s42, 0
      %p154 = por %p152, %p153
      %s155 = ssub.s32 %s44, %s51
      %p156 = scmp.eq.s32.totalorder %s155, 0
      %s158 = sadd.s32 %s157, 1
      %s159 = scalar_select %p156, %s157, %s158
      %p162 = pneg %p156
      %p163 = scmp.eq.s32.totalorder %s36, 3
      %p164 = por %p162, %p163
      %p165 = scmp.ne.s32.totalorder %s157, %s160
      %p166 = scmp.eq.s32.totalorder %s36, 0
      %p167 = por %p165, %p166
      %p168 = scmp.ne.s32.totalorder %s157, %s160
      %p169 = scmp.eq.s32.totalorder %s41, 3
      %p170 = por %p168, %p169
      %p171 = scmp.ne.s32.totalorder %s160, %s161
      %p172 = scmp.eq.s32.totalorder %s41, 0
      %p173 = por %p171, %p172
      %p174 = scmp.ne.s32.totalorder %s160, %s161
      %p175 = scmp.eq.s32.totalorder %s42, 3
      %p176 = por %p174, %p175
      %p178 = scmp.ne.s32.totalorder %s161, %s177
      %p179 = scmp.eq.s32.totalorder %s42, 0
      %p180 = por %p178, %p179
      %s181 = ssub.s32 %s44, %s51
      %p182 = scmp.eq.s32.totalorder %s181, 0
      %s184 = sadd.s32 %s183, 1
      %s185 = scalar_select %p182, %s183, %s184
      %p188 = pneg %p182
      %p189 = scmp.eq.s32.totalorder %s36, 3
      %p190 = por %p188, %p189
      %p191 = scmp.ne.s32.totalorder %s183, %s186
      %p192 = scmp.eq.s32.totalorder %s36, 0
      %p193 = por %p191, %p192
      %p194 = scmp.ne.s32.totalorder %s183, %s186
      %p195 = scmp.eq.s32.totalorder %s41, 3
      %p196 = por %p194, %p195
      %p197 = scmp.ne.s32.totalorder %s186, %s187
      %p198 = scmp.eq.s32.totalorder %s41, 0
      %p199 = por %p197, %p198
      %p200 = scmp.ne.s32.totalorder %s186, %s187
      %p201 = scmp.eq.s32.totalorder %s42, 3
      %p202 = por %p200, %p201
      %p204 = scmp.ne.s32.totalorder %s187, %s203
      %p205 = scmp.eq.s32.totalorder %s42, 0
      %p206 = por %p204, %p205
      %s208 = sadd.s32 %s207, 1
      %p211 = scmp.eq.s32.totalorder %s36, 3
      %p212 = scmp.ne.s32.totalorder %s207, %s209
      %p213 = scmp.eq.s32.totalorder %s36, 0
      %p214 = por %p212, %p213
      %p215 = scmp.ne.s32.totalorder %s207, %s209
      %p216 = scmp.eq.s32.totalorder %s41, 3
      %p217 = por %p215, %p216
      %p218 = scmp.ne.s32.totalorder %s209, %s210
      %p219 = scmp.eq.s32.totalorder %s41, 0
      %p220 = por %p218, %p219
      %p221 = scmp.ne.s32.totalorder %s209, %s210
      %p222 = scmp.eq.s32.totalorder %s42, 3
      %p223 = por %p221, %p222
      %p225 = scmp.ne.s32.totalorder %s210, %s224
      %p226 = scmp.eq.s32.totalorder %s42, 0
      %p227 = por %p225, %p226
      %s229 = sadd.s32 %s228, 1
      %p232 = scmp.eq.s32.totalorder %s36, 3
      %p233 = scmp.ne.s32.totalorder %s228, %s230
      %p234 = scmp.eq.s32.totalorder %s36, 0
      %p235 = por %p233, %p234
      %p236 = scmp.ne.s32.totalorder %s228, %s230
      %p237 = scmp.eq.s32.totalorder %s41, 3
      %p238 = por %p236, %p237
      %p239 = scmp.ne.s32.totalorder %s230, %s231
      %p240 = scmp.eq.s32.totalorder %s41, 0
      %p241 = por %p239, %p240
      %p242 = scmp.ne.s32.totalorder %s230, %s231
      %p243 = scmp.eq.s32.totalorder %s42, 3
      %p244 = por %p242, %p243
      %p246 = scmp.ne.s32.totalorder %s231, %s245
      %p247 = scmp.eq.s32.totalorder %s42, 0
      %p248 = por %p246, %p247
      %s250 = sadd.s32 %s249, 1
      %p253 = scmp.eq.s32.totalorder %s36, 3
      %p254 = scmp.ne.s32.totalorder %s249, %s251
      %p255 = scmp.eq.s32.totalorder %s36, 0
      %p256 = por %p254, %p255
      %p257 = scmp.ne.s32.totalorder %s249, %s251
      %p258 = scmp.eq.s32.totalorder %s41, 3
      %p259 = por %p257, %p258
      %p260 = scmp.ne.s32.totalorder %s251, %s252
      %p261 = scmp.eq.s32.totalorder %s41, 0
      %p262 = por %p260, %p261
      %p263 = scmp.ne.s32.totalorder %s251, %s252
      %p264 = scmp.eq.s32.totalorder %s42, 3
      %p265 = por %p263, %p264
      %p267 = scmp.ne.s32.totalorder %s252, %s266
      %p268 = scmp.eq.s32.totalorder %s42, 0
      %p269 = por %p267, %p268
      %s271 = sadd.s32 %s270, 1
      %p274 = scmp.eq.s32.totalorder %s36, 3
      %p275 = scmp.ne.s32.totalorder %s270, %s272
      %p276 = scmp.eq.s32.totalorder %s36, 0
      %p277 = por %p275, %p276
      %p278 = scmp.ne.s32.totalorder %s270, %s272
      %p279 = scmp.eq.s32.totalorder %s41, 3
      %p280 = por %p278, %p279
      %p281 = scmp.ne.s32.totalorder %s272, %s273
      %p282 = scmp.eq.s32.totalorder %s41, 0
      %p283 = por %p281, %p282
      %p284 = scmp.ne.s32.totalorder %s272, %s273
      %p285 = scmp.eq.s32.totalorder %s42, 3
      %p286 = por %p284, %p285
      %p288 = scmp.ne.s32.totalorder %s273, %s287
      %p289 = scmp.eq.s32.totalorder %s42, 0
      %p290 = por %p288, %p289
      %s292 = sadd.s32 %s291, 1
      %p295 = scmp.eq.s32.totalorder %s36, 3
      %p296 = scmp.ne.s32.totalorder %s291, %s293
      %p297 = scmp.eq.s32.totalorder %s36, 0
      %p298 = por %p296, %p297
      %p299 = scmp.ne.s32.totalorder %s291, %s293
      %p300 = scmp.eq.s32.totalorder %s41, 3
      %p301 = por %p299, %p300
      %p302 = scmp.ne.s32.totalorder %s293, %s294
      %p303 = scmp.eq.s32.totalorder %s41, 0
      %p304 = por %p302, %p303
      %p305 = scmp.ne.s32.totalorder %s293, %s294
      %p306 = scmp.eq.s32.totalorder %s42, 3
      %p307 = por %p305, %p306
      %p309 = scmp.ne.s32.totalorder %s294, %s308
      %p310 = scmp.eq.s32.totalorder %s42, 0
      %p311 = por %p309, %p310
      %s313 = sadd.s32 %s312, 1
      %p316 = scmp.eq.s32.totalorder %s36, 3
      %p317 = scmp.ne.s32.totalorder %s312, %s314
      %p318 = scmp.eq.s32.totalorder %s36, 0
      %p319 = por %p317, %p318
      %p320 = scmp.ne.s32.totalorder %s312, %s314
      %p321 = scmp.eq.s32.totalorder %s41, 3
      %p322 = por %p320, %p321
      %p323 = scmp.ne.s32.totalorder %s314, %s315
      %p324 = scmp.eq.s32.totalorder %s41, 0
      %p325 = por %p323, %p324
      %p326 = scmp.ne.s32.totalorder %s314, %s315
      %p327 = scmp.eq.s32.totalorder %s42, 3
      %p328 = por %p326, %p327
      %p330 = scmp.ne.s32.totalorder %s315, %s329
      %p331 = scmp.eq.s32.totalorder %s42, 0
      %p332 = por %p330, %p331
      %s333 = ssub.s32 %s43, %s55
      %p334 = scmp.eq.s32.totalorder %s333, 0
      %s336 = sadd.s32 %s335, 1
      %s337 = scalar_select %p334, %s335, %s336
      %p340 = pneg %p334
      %p341 = scmp.eq.s32.totalorder %s36, 3
      %p342 = por %p340, %p341
      %p343 = scmp.ne.s32.totalorder %s335, %s338
      %p344 = scmp.eq.s32.totalorder %s36, 0
      %p345 = por %p343, %p344
      %p346 = scmp.ne.s32.totalorder %s335, %s338
      %p347 = scmp.eq.s32.totalorder %s41, 3
      %p348 = por %p346, %p347
      %p349 = scmp.ne.s32.totalorder %s338, %s339
      %p350 = scmp.eq.s32.totalorder %s41, 0
      %p351 = por %p349, %p350
      %p352 = scmp.ne.s32.totalorder %s338, %s339
      %p353 = scmp.eq.s32.totalorder %s42, 3
      %p354 = por %p352, %p353
      %p356 = scmp.ne.s32.totalorder %s339, %s355
      %p357 = scmp.eq.s32.totalorder %s42, 0
      %p358 = por %p356, %p357
      %s359 = ssub.s32 %s43, %s55
      %p360 = scmp.eq.s32.totalorder %s359, 0
      %s362 = sadd.s32 %s361, 1
      %s363 = scalar_select %p360, %s361, %s362
      %p366 = pneg %p360
      %p367 = scmp.eq.s32.totalorder %s36, 3
      %p368 = por %p366, %p367
      %p369 = scmp.ne.s32.totalorder %s361, %s364
      %p370 = scmp.eq.s32.totalorder %s36, 0
      %p371 = por %p369, %p370
      %p372 = scmp.ne.s32.totalorder %s361, %s364
      %p373 = scmp.eq.s32.totalorder %s41, 3
      %p374 = por %p372, %p373
      %p375 = scmp.ne.s32.totalorder %s364, %s365
      %p376 = scmp.eq.s32.totalorder %s41, 0
      %p377 = por %p375, %p376
      %p378 = scmp.ne.s32.totalorder %s364, %s365
      %p379 = scmp.eq.s32.totalorder %s42, 3
      %p380 = por %p378, %p379
      %p382 = scmp.ne.s32.totalorder %s365, %s381
      %p383 = scmp.eq.s32.totalorder %s42, 0
      %p384 = por %p382, %p383
      %p385 = scmp.le.s32.totalorder 1, %s36
      %p386 = scmp.lt.s32.totalorder %s36, 5
      %p387 = pnand %p385, %p386
      %p388 = pneg %p387
      // Predicated region
      $region9: #{tpu_custom_call.1} parent=5 // pred_check
        _
      $region10: #{tpu_custom_call.1} parent=5 // pred_check_branch
        %390 = sbr.rel (%p387) target = $region12
      $region11: #{tpu_custom_call.1} parent=5 // pred_region
        %s391 = ssub.s32 %s36, 1
        // Predicated region
        $region13: #{tpu_custom_call.1} parent=11 // pred_check
          %p392 = pneg %p147
        $region14: #{tpu_custom_call.1} parent=11 // pred_check_branch
          %394 = sbr.rel (%p392) target = $region16
        $region15: #{tpu_custom_call.1} parent=11 // pred_region
          _
        $region16: #{tpu_custom_call.1} parent=11 // pred_fallthru
          _
        // Predicated region
        $region17: #{tpu_custom_call.1} parent=11 // pred_check
          %p395 = pneg %p220
        $region18: #{tpu_custom_call.1} parent=11 // pred_check_branch
          %397 = sbr.rel (%p395) target = $region20
        $region19: #{tpu_custom_call.1} parent=11 // pred_region
          %s399 = ssub.s32 1024, 1024
          %400 = vsyncadd [#allocation10], %s399
          %s401 = sshll.u32 [#allocation11], 4
          %s402 = int_to_ptr.vmem [resolvable:$true] %s401
          %407 = dma.hbm_to_vmem [thread:$0]  %s6, 1024, %s402, [#allocation10], 64, 64, 4
        $region20: #{tpu_custom_call.1} parent=11 // pred_fallthru
          _
        // Predicated region
        $region21: #{tpu_custom_call.1} parent=11 // pred_check
          %p408 = pneg %p241
        $region22: #{tpu_custom_call.1} parent=11 // pred_check_branch
          %410 = sbr.rel (%p408) target = $region24
        $region23: #{tpu_custom_call.1} parent=11 // pred_region
          _
        $region24: #{tpu_custom_call.1} parent=11 // pred_fallthru
          _
        // Predicated region
        $region25: #{tpu_custom_call.1} parent=11 // pred_check
          %p411 = pneg %p262
        $region26: #{tpu_custom_call.1} parent=11 // pred_check_branch
          %413 = sbr.rel (%p411) target = $region28
        $region27: #{tpu_custom_call.1} parent=11 // pred_region
          %s415 = ssub.s32 1024, 1024
          %416 = vsyncadd [#allocation13], %s415
          %s417 = sshll.u32 [#allocation12], 4
          %s418 = int_to_ptr.vmem [resolvable:$true] %s417
          %423 = dma.hbm_to_vmem [thread:$0]  %s8, 1024, %s418, [#allocation13], 64, 64, 4
        $region28: #{tpu_custom_call.1} parent=11 // pred_fallthru
          _
        // Predicated region
        $region29: #{tpu_custom_call.1} parent=11 // pred_check
          %p424 = pneg %p283
        $region30: #{tpu_custom_call.1} parent=11 // pred_check_branch
          %426 = sbr.rel (%p424) target = $region32
        $region31: #{tpu_custom_call.1} parent=11 // pred_region
          _
        $region32: #{tpu_custom_call.1} parent=11 // pred_fallthru
          _
        // Predicated region
        $region33: #{tpu_custom_call.1} parent=11 // pred_check
          %p427 = pneg %p304
        $region34: #{tpu_custom_call.1} parent=11 // pred_check_branch
          %429 = sbr.rel (%p427) target = $region36
        $region35: #{tpu_custom_call.1} parent=11 // pred_region
          %s431 = ssub.s32 1024, 1024
          %432 = vsyncadd [#allocation13], %s431
          %s433 = sshll.u32 [#allocation14], 4
          %s434 = int_to_ptr.vmem [resolvable:$true] %s433
          %439 = dma.hbm_to_vmem [thread:$0]  %s10, 1024, %s434, [#allocation13], 64, 64, 4
        $region36: #{tpu_custom_call.1} parent=11 // pred_fallthru
          _
        // Predicated region
        $region37: #{tpu_custom_call.1} parent=11 // pred_check
          %p440 = pneg %p325
        $region38: #{tpu_custom_call.1} parent=11 // pred_check_branch
          %442 = sbr.rel (%p440) target = $region40
        $region39: #{tpu_custom_call.1} parent=11 // pred_region
          _
        $region40: #{tpu_custom_call.1} parent=11 // pred_fallthru
          _
      $region12: #{tpu_custom_call.1} parent=5 // pred_fallthru
        _
      %p443 = scmp.lt.s32.totalorder %s36, 4
      // Predicated region
      $region41: #{tpu_custom_call.1} parent=5 // pred_check
        %p444 = pneg %p443
      $region42: #{tpu_custom_call.1} parent=5 // pred_check_branch
        %446 = sbr.rel (%p444) target = $region44
      $region43: #{tpu_custom_call.1} parent=5 // pred_region
        // Predicated region
        $region45: #{tpu_custom_call.1} parent=43 // pred_check
          %p447 = pneg %p68
        $region46: #{tpu_custom_call.1} parent=43 // pred_check_branch
          %449 = sbr.rel (%p447) target = $region48
        $region47: #{tpu_custom_call.1} parent=43 // pred_region
          %s450 = sand.u32 %s58, 1
          %s451 = scalar_lea.sflag [#allocation4], %s450
          %s452 = sand.u32 %s58, 1
          %s453 = smul.addr %s452, 8
          %s454 = scalar_lea.vmem [#allocation3], %s453
          %s456 = ssub.s32 128, 128
          %457 = vsyncadd %s451, %s456
          %s458 = smul.addr %s43, 128
          %s459 = scalar_lea.hbm %s0, %s458
          %s461 = sshll.u32 %s454, 4
          %s462 = int_to_ptr.vmem [resolvable:$true] %s461
          %464 = dma.hbm_to_vmem [thread:$0]  %s459, 128, %s462, %s451
        $region48: #{tpu_custom_call.1} parent=43 // pred_fallthru
          _
        // Predicated region
        $region49: #{tpu_custom_call.1} parent=43 // pred_check
          %p465 = pneg %p94
        $region50: #{tpu_custom_call.1} parent=43 // pred_check_branch
          %467 = sbr.rel (%p465) target = $region52
        $region51: #{tpu_custom_call.1} parent=43 // pred_region
          %s468 = sand.u32 %s36, 1
          %s469 = scalar_lea.sflag [#allocation7], %s468
          %s470 = sand.u32 %s84, 1
          %s471 = smul.addr %s470, 64
          %s472 = scalar_lea.vmem [#allocation6], %s471
          %s474 = ssub.s32 1024, 1024
          %475 = vsyncadd %s469, %s474
          %s476 = smul.addr %s43, 16
          %s477 = smul.addr %s476, 64
          %s478 = scalar_lea.hbm %s1, %s477
          %s479 = sshll.u32 %s472, 4
          %s480 = int_to_ptr.vmem [resolvable:$true] %s479
          %485 = dma.hbm_to_vmem [thread:$0]  %s478, 1024, %s480, %s469, 64, 64, 4
        $region52: #{tpu_custom_call.1} parent=43 // pred_fallthru
          _
        // Predicated region
        $region53: #{tpu_custom_call.1} parent=43 // pred_check
          %p486 = pneg %p120
        $region54: #{tpu_custom_call.1} parent=43 // pred_check_branch
          %488 = sbr.rel (%p486) target = $region56
        $region55: #{tpu_custom_call.1} parent=43 // pred_region
          %s489 = sand.u32 %s36, 1
          %s490 = scalar_lea.sflag [#allocation7], %s489
          %s491 = sand.u32 %s110, 1
          %s492 = smul.addr %s491, 64
          %s493 = scalar_lea.vmem [#allocation8], %s492
          %s495 = ssub.s32 1024, 1024
          %496 = vsyncadd %s490, %s495
          %s497 = smul.addr %s43, 16
          %s498 = smul.addr %s497, 64
          %s499 = scalar_lea.hbm %s2, %s498
          %s500 = sshll.u32 %s493, 4
          %s501 = int_to_ptr.vmem [resolvable:$true] %s500
          %506 = dma.hbm_to_vmem [thread:$0]  %s499, 1024, %s501, %s490, 64, 64, 4
        $region56: #{tpu_custom_call.1} parent=43 // pred_fallthru
          _
        // Predicated region
        $region57: #{tpu_custom_call.1} parent=43 // pred_check
          %p507 = pneg %p167
        $region58: #{tpu_custom_call.1} parent=43 // pred_check_branch
          %509 = sbr.rel (%p507) target = $region60
        $region59: #{tpu_custom_call.1} parent=43 // pred_region
          %s510 = sand.u32 %s36, 1
          %s511 = scalar_lea.sflag [#allocation10], %s510
          %s512 = sand.u32 %s157, 1
          %s513 = smul.addr %s512, 384
          %s514 = scalar_lea.vmem [#allocation9], %s513
          %s516 = ssub.s32 6144, 6144
          %517 = vsyncadd %s511, %s516
          %s518 = smul.addr %s44, 96
          %s519 = smul.addr %s518, 64
          %s520 = scalar_lea.hbm %s4, %s519
          %s521 = sshll.u32 %s514, 4
          %s522 = int_to_ptr.vmem [resolvable:$true] %s521
          %527 = dma.hbm_to_vmem [thread:$0]  %s520, 6144, %s522, %s511, 128, 128, 8
        $region60: #{tpu_custom_call.1} parent=43 // pred_fallthru
          _
        // Predicated region
        $region61: #{tpu_custom_call.1} parent=43 // pred_check
          %p528 = pneg %p193
        $region62: #{tpu_custom_call.1} parent=43 // pred_check_branch
          %530 = sbr.rel (%p528) target = $region64
        $region63: #{tpu_custom_call.1} parent=43 // pred_region
          %p531 = scmp.lt.s32.totalorder %s44, 1
          %s532 = scalar_select %p531, %s44, 1
          %s533 = smul.addr %s532, 2
          %s534 = scalar_lea.vmem %s5, %s533
        $region64: #{tpu_custom_call.1} parent=43 // pred_fallthru
          _
      $region44: #{tpu_custom_call.1} parent=5 // pred_fallthru
        _
      %p535 = scmp.le.s32.totalorder 1, %s36
      %p536 = scmp.lt.s32.totalorder %s36, 5
      %p537 = pnand %p535, %p536
      %p538 = pneg %p537
      // Predicated region
      $region65: #{tpu_custom_call.1} parent=5 // pred_check
        _
      $region66: #{tpu_custom_call.1} parent=5 // pred_check_branch
        %540 = sbr.rel (%p537) target = $region68
      $region67: #{tpu_custom_call.1} parent=5 // pred_region
        %s541 = ssub.s32 %s36, 1
        %s542 = sand.u32 %s61, 1
        %s543 = scalar_lea.sflag [#allocation4], %s542
        %s544 = sand.u32 %s61, 1
        %s545 = smul.addr %s544, 8
        %s546 = scalar_lea.vmem [#allocation3], %s545
        // Predicated region
        $region69: #{tpu_custom_call.1} parent=67 // pred_check
          %p547 = pneg %p74
        $region70: #{tpu_custom_call.1} parent=67 // pred_check_branch
          %549 = sbr.rel (%p547) target = $region72
        $region71: #{tpu_custom_call.1} parent=67 // pred_region
          %550 = dma.done %s543, 128
        $region72: #{tpu_custom_call.1} parent=67 // pred_fallthru
          _
        %s551 = sand.u32 %s41, 1
        %s552 = scalar_lea.sflag [#allocation7], %s551
        %s553 = sand.u32 %s87, 1
        %s554 = smul.addr %s553, 64
        %s555 = scalar_lea.vmem [#allocation6], %s554
        // Predicated region
        $region73: #{tpu_custom_call.1} parent=67 // pred_check
          %p556 = pneg %p100
        $region74: #{tpu_custom_call.1} parent=67 // pred_check_branch
          %558 = sbr.rel (%p556) target = $region76
        $region75: #{tpu_custom_call.1} parent=67 // pred_region
          %559 = dma.done %s552, 1024
        $region76: #{tpu_custom_call.1} parent=67 // pred_fallthru
          _
        %s560 = sand.u32 %s41, 1
        %s561 = scalar_lea.sflag [#allocation7], %s560
        %s562 = sand.u32 %s113, 1
        %s563 = smul.addr %s562, 64
        %s564 = scalar_lea.vmem [#allocation8], %s563
        // Predicated region
        $region77: #{tpu_custom_call.1} parent=67 // pred_check
          %p565 = pneg %p126
        $region78: #{tpu_custom_call.1} parent=67 // pred_check_branch
          %567 = sbr.rel (%p565) target = $region80
        $region79: #{tpu_custom_call.1} parent=67 // pred_region
          %568 = dma.done %s561, 1024
        $region80: #{tpu_custom_call.1} parent=67 // pred_fallthru
          _
        %s569 = sand.u32 %s41, 1
        %s570 = scalar_lea.sflag [#allocation10], %s569
        %s571 = sand.u32 %s160, 1
        %s572 = smul.addr %s571, 384
        %s573 = scalar_lea.vmem [#allocation9], %s572
        // Predicated region
        $region81: #{tpu_custom_call.1} parent=67 // pred_check
          %p574 = pneg %p173
        $region82: #{tpu_custom_call.1} parent=67 // pred_check_branch
          %576 = sbr.rel (%p574) target = $region84
        $region83: #{tpu_custom_call.1} parent=67 // pred_region
          %577 = dma.done %s570, 6144
        $region84: #{tpu_custom_call.1} parent=67 // pred_fallthru
          _
        // Predicated region
        $region85: #{tpu_custom_call.1} parent=67 // pred_check
          %p578 = pneg %p220
        $region86: #{tpu_custom_call.1} parent=67 // pred_check_branch
          %580 = sbr.rel (%p578) target = $region88
        $region87: #{tpu_custom_call.1} parent=67 // pred_region
          %581 = dma.done [#allocation10], 1024
        $region88: #{tpu_custom_call.1} parent=67 // pred_fallthru
          _
        // Predicated region
        $region89: #{tpu_custom_call.1} parent=67 // pred_check
          %p582 = pneg %p262
        $region90: #{tpu_custom_call.1} parent=67 // pred_check_branch
          %584 = sbr.rel (%p582) target = $region92
        $region91: #{tpu_custom_call.1} parent=67 // pred_region
          %585 = dma.done [#allocation13], 1024
        $region92: #{tpu_custom_call.1} parent=67 // pred_fallthru
          _
        // Predicated region
        $region93: #{tpu_custom_call.1} parent=67 // pred_check
          %p586 = pneg %p304
        $region94: #{tpu_custom_call.1} parent=67 // pred_check_branch
          %588 = sbr.rel (%p586) target = $region96
        $region95: #{tpu_custom_call.1} parent=67 // pred_region
          %589 = dma.done [#allocation13], 1024
        $region96: #{tpu_custom_call.1} parent=67 // pred_fallthru
          _
        %s590 = sand.u32 %s61, 1
        %s591 = scalar_lea.sflag [#allocation4], %s590
        %s592 = sand.u32 %s61, 1
        %s593 = smul.addr %s592, 8
        %s594 = scalar_lea.vmem [#allocation3], %s593
        %p595 = pneg %p74
        %p596 = pneg %p71
        %s597 = sand.u32 %s41, 1
        %s598 = scalar_lea.sflag [#allocation7], %s597
        %s599 = sand.u32 %s87, 1
        %s600 = smul.addr %s599, 64
        %s601 = scalar_lea.vmem [#allocation6], %s600
        %p602 = pneg %p100
        %p603 = pneg %p97
        %s604 = sand.u32 %s41, 1
        %s605 = scalar_lea.sflag [#allocation7], %s604
        %s606 = sand.u32 %s113, 1
        %s607 = smul.addr %s606, 64
        %s608 = scalar_lea.vmem [#allocation8], %s607
        %p609 = pneg %p126
        %p610 = pneg %p123
        %p611 = pneg %p147
        %p612 = pneg %p144
        %s613 = sand.u32 %s41, 1
        %s614 = scalar_lea.sflag [#allocation10], %s613
        %s615 = sand.u32 %s160, 1
        %s616 = smul.addr %s615, 384
        %s617 = scalar_lea.vmem [#allocation9], %s616
        %p618 = pneg %p173
        %p619 = pneg %p170
        %p620 = scmp.lt.s32.totalorder %s46, 1
        %s621 = scalar_select %p620, %s46, 1
        %s622 = smul.addr %s621, 2
        %s623 = scalar_lea.vmem %s5, %s622
        %p624 = pneg %p199
        %p625 = pneg %p196
        %p626 = pneg %p220
        %p627 = pneg %p217
        %p628 = pneg %p241
        %p629 = pneg %p238
        %p630 = pneg %p262
        %p631 = pneg %p259
        %p632 = pneg %p283
        %p633 = pneg %p280
        %p634 = pneg %p304
        %p635 = pneg %p301
        %p636 = pneg %p325
        %p637 = pneg %p322
        %p638 = pneg %p351
        %p639 = pneg %p348
        %s640 = sand.u32 %s338, 1
        %s641 = scalar_lea.sflag [#allocation5], %s640
        %s642 = sand.u32 %s338, 1
        %s643 = smul.addr %s642, 8
        %s644 = scalar_lea.vmem [#allocation15], %s643
        %p645 = pneg %p377
        %p646 = pneg %p374
        %s647 = sand.u32 %s364, 1
        %s648 = scalar_lea.sflag [#allocation17], %s647
        %s649 = sand.u32 %s364, 1
        %s650 = smul.addr %s649, 8
        %s651 = scalar_lea.vmem [#allocation16], %s650
        %p652 = scmp.lt.s32.totalorder %s46, 1
        %s653 = scalar_select %p652, %s46, 1
        %s654 = smul.addr %s653, 2
        %s655 = scalar_lea.vmem %s5, %s654
        %p658 = scmp.eq.s32.totalorder %s46, 0
        // Predicated region
        $region97: #{tpu_custom_call.1} parent=67 // pred_check
          %p659 = pneg %p658
        $region98: #{tpu_custom_call.1} parent=67 // pred_check_branch
          %661 = sbr.rel (%p659) target = $region100
        $region99: #{tpu_custom_call.1} parent=67 // pred_region
          %v662 = vld [vmem:[%s546] sm:$0xff]
          %663 = vst [vmem:[%s644] sm:$0xff] %v662
          %664 = vst [vmem:[#allocation2] sm:$0x1] 1065369472
          %vm665 = vcmask 1040384
          %vm666 = vsmask.f32 256
          %vm667 = vmand %vm665, %vm666
          %v668 = vld [vmem:[#allocation2 + $0x4] sm:$0x1]
          %v669 = vsel %vm667, 1065369472, %v668
          %670 = vst [vmem:[#allocation2 + $0x4] sm:$0x1] %v669
        $region100: #{tpu_custom_call.1} parent=67 // pred_fallthru
          _
        %v671 = vld [vmem:[%s644] sm:$0xff]
        %v672 = vpack.c.bf16 %v671, %v671
        %v674 = vunpack.c.l.b16 %v672
        %v675 = vpack.c.b16 %v674, %v674
        %v676 = vrot.slane %v675, 7
        %678 = vst [vmem:[#allocation2] sm:$0xe] %v676
        %v680 = vshrl.u32 %v675, 16
        %v682 = vrot.slane %v680, 7
        %v683 = vshll.u32 %v675, 16
        %v685 = vor.u32 %v682, %v683
        %vm687 = vcmask 1043456
        %vm688 = vsmask.f32 7938
        %vm689 = vmand %vm687, %vm688
        %v690 = vld [vmem:[#allocation2 + $0x4] sm:$0xf]
        %v691 = vsel %vm689, %v685, %v690
        %692 = vst [vmem:[#allocation2 + $0x4] sm:$0xf] %v691
        %693 = vst [vmem:[#allocation2 + $0x8] sm:$0xf] %v672
        %v694 = vld [vmem:[#allocation2] sm:$0xff]
        %v695 = vld [vmem:[#allocation2 + $0x8] sm:$0xf]
        %v696 = vld [vmem:[%s573] sm:$0xff]
        %v697 = vld [vmem:[%s573 + $0x8] sm:$0xff]
        %v698 = vld [vmem:[%s573 + $0x10] sm:$0xff]
        %v699 = vld [vmem:[%s573 + $0x18] sm:$0xff]
        %v700 = vld [vmem:[%s573 + $0x20] sm:$0xff]
        %v701 = vld [vmem:[%s573 + $0x28] sm:$0xff]
        %v702 = vld [vmem:[%s573 + $0x30] sm:$0xff]
        %v703 = vld [vmem:[%s573 + $0x38] sm:$0xff]
        %v704 = vld [vmem:[%s573 + $0x40] sm:$0xff]
        %v705 = vld [vmem:[%s573 + $0x48] sm:$0xff]
        %v706 = vld [vmem:[%s573 + $0x50] sm:$0xff]
        %v707 = vld [vmem:[%s573 + $0x58] sm:$0xff]
        %v708 = vld [vmem:[%s573 + $0x60] sm:$0xff]
        %v709 = vld [vmem:[%s573 + $0x68] sm:$0xff]
        %v710 = vld [vmem:[%s573 + $0x70] sm:$0xff]
        %v711 = vld [vmem:[%s573 + $0x78] sm:$0xff]
        %v712 = vld [vmem:[%s573 + $0x80] sm:$0xff]
        %v713 = vld [vmem:[%s573 + $0x88] sm:$0xff]
        %v714 = vld [vmem:[%s573 + $0x90] sm:$0xff]
        %v715 = vld [vmem:[%s573 + $0x98] sm:$0xff]
        %v716 = vld [vmem:[%s573 + $0xa0] sm:$0xff]
        %v717 = vld [vmem:[%s573 + $0xa8] sm:$0xff]
        %v718 = vld [vmem:[%s573 + $0xb0] sm:$0xff]
        %v719 = vld [vmem:[%s573 + $0xb8] sm:$0xff]
        %v720 = vld [vmem:[%s573 + $0xc0] sm:$0xff]
        %v721 = vld [vmem:[%s573 + $0xc8] sm:$0xff]
        %v722 = vld [vmem:[%s573 + $0xd0] sm:$0xff]
        %v723 = vld [vmem:[%s573 + $0xd8] sm:$0xff]
        %v724 = vld [vmem:[%s573 + $0xe0] sm:$0xff]
        %v725 = vld [vmem:[%s573 + $0xe8] sm:$0xff]
        %v726 = vld [vmem:[%s573 + $0xf0] sm:$0xff]
        %v727 = vld [vmem:[%s573 + $0xf8] sm:$0xff]
        %v728 = vld [vmem:[%s573 + $0x100] sm:$0xff]
        %v729 = vld [vmem:[%s573 + $0x108] sm:$0xff]
        %v730 = vld [vmem:[%s573 + $0x110] sm:$0xff]
        %v731 = vld [vmem:[%s573 + $0x118] sm:$0xff]
        %v732 = vld [vmem:[%s573 + $0x120] sm:$0xff]
        %v733 = vld [vmem:[%s573 + $0x128] sm:$0xff]
        %v734 = vld [vmem:[%s573 + $0x130] sm:$0xff]
        %v735 = vld [vmem:[%s573 + $0x138] sm:$0xff]
        %v736 = vld [vmem:[%s573 + $0x140] sm:$0xff]
        %v737 = vld [vmem:[%s573 + $0x148] sm:$0xff]
        %v738 = vld [vmem:[%s573 + $0x150] sm:$0xff]
        %v739 = vld [vmem:[%s573 + $0x158] sm:$0xff]
        %v740 = vld [vmem:[%s573 + $0x160] sm:$0xff]
        %v741 = vld [vmem:[%s573 + $0x168] sm:$0xff]
        %v742 = vld [vmem:[%s573 + $0x170] sm:$0xff]
        %v743 = vld [vmem:[%s573 + $0x178] sm:$0xff]
        %v744 = vld [vmem:[%s655] sm:$0x3]
        %v746 = vlaneseq
        %v747 = vshrl.u32 %v746, 7
        %v748 = vsub.s32 0, %v747
        %v749 = vrot.slane %v744, %v748
        %v750 = vlaneseq
        %v751 = vshrl.u32 %v750, 7
        %v752 = vsub.s32 1, %v751
        %v753 = vrot.slane %v744, %v752
        %v758 = vunpack.c.l.b16 %v694
        %v759 = vunpack.c.h.b16 %v694
        %v760 = vunpack.c.l.b16 %v695
        %v761 = vpack.c.b16 %v758, %v758
        %v762 = vpack.c.b16 %v759, %v759
        %v763 = vpack.c.b16 %v760, %v760
        %v815 = vunpack.c.l.b16 %v696
        %v816 = vunpack.c.h.b16 %v696
        %v817 = vunpack.c.l.b16 %v697
        %v818 = vunpack.c.h.b16 %v697
        %v819 = vunpack.c.l.b16 %v698
        %v820 = vunpack.c.h.b16 %v698
        %v821 = vunpack.c.l.b16 %v699
        %v822 = vunpack.c.h.b16 %v699
        %v823 = vunpack.c.l.b16 %v700
        %v824 = vunpack.c.h.b16 %v700
        %v825 = vunpack.c.l.b16 %v701
        %v826 = vunpack.c.h.b16 %v701
        %v827 = vunpack.c.l.b16 %v702
        %v828 = vunpack.c.h.b16 %v702
        %v829 = vunpack.c.l.b16 %v703
        %v830 = vunpack.c.h.b16 %v703
        %v831 = vunpack.c.l.b16 %v704
        %v832 = vunpack.c.h.b16 %v704
        %v833 = vunpack.c.l.b16 %v705
        %v834 = vunpack.c.h.b16 %v705
        %v835 = vunpack.c.l.b16 %v706
        %v836 = vunpack.c.h.b16 %v706
        %v837 = vunpack.c.l.b16 %v707
        %v838 = vunpack.c.h.b16 %v707
        %v839 = vunpack.c.l.b16 %v708
        %v840 = vunpack.c.h.b16 %v708
        %v841 = vunpack.c.l.b16 %v709
        %v842 = vunpack.c.h.b16 %v709
        %v843 = vunpack.c.l.b16 %v710
        %v844 = vunpack.c.h.b16 %v710
        %v845 = vunpack.c.l.b16 %v711
        %v846 = vunpack.c.h.b16 %v711
        %v847 = vunpack.c.l.b16 %v712
        %v848 = vunpack.c.h.b16 %v712
        %v849 = vunpack.c.l.b16 %v713
        %v850 = vunpack.c.h.b16 %v713
        %v851 = vunpack.c.l.b16 %v714
        %v852 = vunpack.c.h.b16 %v714
        %v853 = vunpack.c.l.b16 %v715
        %v854 = vunpack.c.h.b16 %v715
        %v855 = vunpack.c.l.b16 %v716
        %v856 = vunpack.c.h.b16 %v716
        %v857 = vunpack.c.l.b16 %v717
        %v858 = vunpack.c.h.b16 %v717
        %v859 = vunpack.c.l.b16 %v718
        %v860 = vunpack.c.h.b16 %v718
        %v861 = vunpack.c.l.b16 %v719
        %v862 = vunpack.c.h.b16 %v719
        %v863 = vunpack.c.l.b16 %v720
        %v864 = vunpack.c.h.b16 %v720
        %v865 = vunpack.c.l.b16 %v721
        %v866 = vunpack.c.h.b16 %v721
        %v867 = vunpack.c.l.b16 %v722
        %v868 = vunpack.c.h.b16 %v722
        %v869 = vunpack.c.l.b16 %v723
        %v870 = vunpack.c.h.b16 %v723
        %v871 = vunpack.c.l.b16 %v724
        %v872 = vunpack.c.h.b16 %v724
        %v873 = vunpack.c.l.b16 %v725
        %v874 = vunpack.c.h.b16 %v725
        %v875 = vunpack.c.l.b16 %v726
        %v876 = vunpack.c.h.b16 %v726
        %v877 = vunpack.c.l.b16 %v727
        %v878 = vunpack.c.h.b16 %v727
        %v879 = vunpack.c.l.b16 %v728
        %v880 = vunpack.c.h.b16 %v728
        %v881 = vunpack.c.l.b16 %v729
        %v882 = vunpack.c.h.b16 %v729
        %v883 = vunpack.c.l.b16 %v730
        %v884 = vunpack.c.h.b16 %v730
        %v885 = vunpack.c.l.b16 %v731
        %v886 = vunpack.c.h.b16 %v731
        %v887 = vunpack.c.l.b16 %v732
        %v888 = vunpack.c.h.b16 %v732
        %v889 = vunpack.c.l.b16 %v733
        %v890 = vunpack.c.h.b16 %v733
        %v891 = vunpack.c.l.b16 %v734
        %v892 = vunpack.c.h.b16 %v734
        %v893 = vunpack.c.l.b16 %v735
        %v894 = vunpack.c.h.b16 %v735
        %v895 = vunpack.c.l.b16 %v736
        %v896 = vunpack.c.h.b16 %v736
        %v897 = vunpack.c.l.b16 %v737
        %v898 = vunpack.c.h.b16 %v737
        %v899 = vunpack.c.l.b16 %v738
        %v900 = vunpack.c.h.b16 %v738
        %v901 = vunpack.c.l.b16 %v739
        %v902 = vunpack.c.h.b16 %v739
        %v903 = vunpack.c.l.b16 %v740
        %v904 = vunpack.c.h.b16 %v740
        %v905 = vunpack.c.l.b16 %v741
        %v906 = vunpack.c.h.b16 %v741
        %v907 = vunpack.c.l.b16 %v742
        %v908 = vunpack.c.h.b16 %v742
        %v909 = vunpack.c.l.b16 %v743
        %v910 = vunpack.c.h.b16 %v743
        %v911 = vpack.c.b16 %v817, %v815
        %v912 = vpack.c.b16 %v818, %v816
        %v913 = vpack.c.b16 %v821, %v819
        %v914 = vpack.c.b16 %v822, %v820
        %v915 = vpack.c.b16 %v825, %v823
        %v916 = vpack.c.b16 %v826, %v824
        %v917 = vpack.c.b16 %v829, %v827
        %v918 = vpack.c.b16 %v830, %v828
        %v919 = vpack.c.b16 %v833, %v831
        %v920 = vpack.c.b16 %v834, %v832
        %v921 = vpack.c.b16 %v837, %v835
        %v922 = vpack.c.b16 %v838, %v836
        %v923 = vpack.c.b16 %v841, %v839
        %v924 = vpack.c.b16 %v842, %v840
        %v925 = vpack.c.b16 %v845, %v843
        %v926 = vpack.c.b16 %v846, %v844
        %v927 = vpack.c.b16 %v849, %v847
        %v928 = vpack.c.b16 %v850, %v848
        %v929 = vpack.c.b16 %v853, %v851
        %v930 = vpack.c.b16 %v854, %v852
        %v931 = vpack.c.b16 %v857, %v855
        %v932 = vpack.c.b16 %v858, %v856
        %v933 = vpack.c.b16 %v861, %v859
        %v934 = vpack.c.b16 %v862, %v860
        %v935 = vpack.c.b16 %v865, %v863
        %v936 = vpack.c.b16 %v866, %v864
        %v937 = vpack.c.b16 %v869, %v867
        %v938 = vpack.c.b16 %v870, %v868
        %v939 = vpack.c.b16 %v873, %v871
        %v940 = vpack.c.b16 %v874, %v872
        %v941 = vpack.c.b16 %v877, %v875
        %v942 = vpack.c.b16 %v878, %v876
        %v943 = vpack.c.b16 %v881, %v879
        %v944 = vpack.c.b16 %v882, %v880
        %v945 = vpack.c.b16 %v885, %v883
        %v946 = vpack.c.b16 %v886, %v884
        %v947 = vpack.c.b16 %v889, %v887
        %v948 = vpack.c.b16 %v890, %v888
        %v949 = vpack.c.b16 %v893, %v891
        %v950 = vpack.c.b16 %v894, %v892
        %v951 = vpack.c.b16 %v897, %v895
        %v952 = vpack.c.b16 %v898, %v896
        %v953 = vpack.c.b16 %v901, %v899
        %v954 = vpack.c.b16 %v902, %v900
        %v955 = vpack.c.b16 %v905, %v903
        %v956 = vpack.c.b16 %v906, %v904
        %v957 = vpack.c.b16 %v909, %v907
        %v958 = vpack.c.b16 %v910, %v908
        %1007 = vmatprep.subr.bf16.mxu0 %v912
        %1008 = vmatpush1.bf16.msra.mxu0 %v911
        %1009 = vmatprep.subr.bf16.mxu0 %v914
        %1010 = vmatpush1.bf16.msra.mxu0 %v913
        %1011 = vmatprep.subr.bf16.mxu0 %v916
        %1012 = vmatpush1.bf16.msra.mxu0 %v915
        %1013 = vmatprep.subr.bf16.mxu0 %v918
        %1014 = vmatpush1.bf16.msra.mxu0 %v917
        %1015 = vmatprep.subr.bf16.mxu0 %v920
        %1016 = vmatpush1.bf16.msra.mxu0 %v919
        %1017 = vmatprep.subr.bf16.mxu0 %v922
        %1018 = vmatpush1.bf16.msra.mxu0 %v921
        %1019 = vmatprep.subr.bf16.mxu0 %v924
        %1020 = vmatpush1.bf16.msra.mxu0 %v923
        %1021 = vmatprep.subr.bf16.mxu0 %v926
        %1022 = vmatpush1.bf16.msra.mxu0 %v925
        %1023 = vmatprep.subr.bf16.mxu0 %v928
        %1024 = vmatpush1.bf16.msra.mxu0 %v927
        %1025 = vmatprep.subr.bf16.mxu0 %v930
        %1026 = vmatpush1.bf16.msra.mxu0 %v929
        %1027 = vmatprep.subr.bf16.mxu0 %v932
        %1028 = vmatpush1.bf16.msra.mxu0 %v931
        %1029 = vmatprep.subr.bf16.mxu0 %v934
        %1030 = vmatpush1.bf16.msra.mxu0 %v933
        %1031 = vmatprep.subr.bf16.mxu0 %v936
        %1032 = vmatpush1.bf16.msra.mxu0 %v935
        %1033 = vmatprep.subr.bf16.mxu0 %v938
        %1034 = vmatpush1.bf16.msra.mxu0 %v937
        %1035 = vmatprep.subr.bf16.mxu0 %v940
        %1036 = vmatpush1.bf16.msra.mxu0 %v939
        %1037 = vmatprep.subr.bf16.mxu0 %v942
        %1038 = vmatpush1.bf16.msra.mxu0 %v941
        %1039 = vmatprep.mubr.bf16.mxu0 %v762
        %1040 = vmatmul.mubr.bf16.gmra.mrb[0].mxu0 %v761
        %v1041 = vpop.f32.mrb[0].mxu0
        %v1042 = vadd.f32 %v749, %v1041
        %v1043 = vpop.f32.mrb[0].mxu0
        %v1044 = vadd.f32 %v753, %v1043
        %v1045 = vpop.f32.mrb[0].mxu0
        %v1046 = vpop.f32.mrb[0].mxu0
        %1047 = vdwg.mxu0
        %1048 = vmatprep.subr.bf16.mxu0 %v944
        %1049 = vmatpush1.bf16.msra.mxu0 %v943
        %1050 = vmatprep.subr.bf16.mxu0 %v946
        %1051 = vmatpush1.bf16.msra.mxu0 %v945
        %1052 = vmatprep.subr.bf16.mxu0 %v948
        %1053 = vmatpush1.bf16.msra.mxu0 %v947
        %1054 = vmatprep.subr.bf16.mxu0 %v950
        %1055 = vmatpush1.bf16.msra.mxu0 %v949
        %1056 = vmatprep.subr.bf16.mxu0 %v952
        %1057 = vmatpush1.bf16.msra.mxu0 %v951
        %1058 = vmatprep.subr.bf16.mxu0 %v954
        %1059 = vmatpush1.bf16.msra.mxu0 %v953
        %1060 = vmatprep.subr.bf16.mxu0 %v956
        %1061 = vmatpush1.bf16.msra.mxu0 %v955
        %1062 = vmatprep.subr.bf16.mxu0 %v958
        %1063 = vmatpush1.bf16.msra.mxu0 %v957
        %1064 = vmatprep.subr.bf16.mxu0 0
        %1065 = vmatpush1.bf16.msra.mxu0 0
        %1066 = vmatprep.subr.bf16.mxu0 0
        %1067 = vmatpush1.bf16.msra.mxu0 0
        %1068 = vmatprep.subr.bf16.mxu0 0
        %1069 = vmatpush1.bf16.msra.mxu0 0
        %1070 = vmatprep.subr.bf16.mxu0 0
        %1071 = vmatpush1.bf16.msra.mxu0 0
        %1072 = vmatprep.subr.bf16.mxu0 0
        %1073 = vmatpush1.bf16.msra.mxu0 0
        %1074 = vmatprep.subr.bf16.mxu0 0
        %1075 = vmatpush1.bf16.msra.mxu0 0
        %1076 = vmatprep.subr.bf16.mxu0 0
        %1077 = vmatpush1.bf16.msra.mxu0 0
        %1078 = vmatprep.subr.bf16.mxu0 0
        %1079 = vmatpush1.bf16.msra.mxu0 0
        %1080 = vmatprep.mubr.bf16.mxu0 0
        %1081 = vmatmul.mubr.bf16.gmra.mrb[0].mxu0 %v763
        %v1082 = vpop.f32.mrb[0].mxu0
        %v1083 = vadd.f32 %v1042, %v1082
        %v1084 = vpop.f32.mrb[0].mxu0
        %v1085 = vadd.f32 %v1044, %v1084
        %v1086 = vpop.f32.mrb[0].mxu0
        %v1087 = vpop.f32.mrb[0].mxu0
        %1088 = vdwg.mxu0
        %v1089 = vsub.f32 0.0, %v1085
        %v1090 = vmul.f32 %v1089, 1.442695
        %v1091 = vpow.pop %v1090
        %v1092 = vadd.f32 %v1091, 1.0
        %v1093 = vrcp.pop %v1092
        %v1094 = vmul.f32 %v1083, %v1093
        %v1095 = vpack.c.bf16 %v1094, %v1094
        %v1096 = vld [vmem:[#allocation11] sm:$0xf]
        %v1097 = vld [vmem:[#allocation11 + $0x4] sm:$0xf]
        %v1098 = vld [vmem:[#allocation11 + $0x8] sm:$0xf]
        %v1099 = vld [vmem:[#allocation11 + $0xc] sm:$0xf]
        %v1100 = vld [vmem:[#allocation11 + $0x10] sm:$0xf]
        %v1101 = vld [vmem:[#allocation11 + $0x14] sm:$0xf]
        %v1102 = vld [vmem:[#allocation11 + $0x18] sm:$0xf]
        %v1103 = vld [vmem:[#allocation11 + $0x1c] sm:$0xf]
        %v1104 = vld [vmem:[#allocation11 + $0x20] sm:$0xf]
        %v1105 = vld [vmem:[#allocation11 + $0x24] sm:$0xf]
        %v1106 = vld [vmem:[#allocation11 + $0x28] sm:$0xf]
        %v1107 = vld [vmem:[#allocation11 + $0x2c] sm:$0xf]
        %v1108 = vld [vmem:[#allocation11 + $0x30] sm:$0xf]
        %v1109 = vld [vmem:[#allocation11 + $0x34] sm:$0xf]
        %v1110 = vld [vmem:[#allocation11 + $0x38] sm:$0xf]
        %v1111 = vld [vmem:[#allocation11 + $0x3c] sm:$0xf]
        %v1112 = vld [vmem:[%s7] sm:$0x1]
        %v1114 = vlaneseq
        %v1115 = vshrl.u32 %v1114, 7
        %v1116 = vsub.s32 0, %v1115
        %v1117 = vrot.slane %v1112, %v1116
        %v1135 = vunpack.c.l.b16 %v1096
        %v1136 = vunpack.c.l.b16 %v1097
        %v1137 = vunpack.c.l.b16 %v1098
        %v1138 = vunpack.c.l.b16 %v1099
        %v1139 = vunpack.c.l.b16 %v1100
        %v1140 = vunpack.c.l.b16 %v1101
        %v1141 = vunpack.c.l.b16 %v1102
        %v1142 = vunpack.c.l.b16 %v1103
        %v1143 = vunpack.c.l.b16 %v1104
        %v1144 = vunpack.c.l.b16 %v1105
        %v1145 = vunpack.c.l.b16 %v1106
        %v1146 = vunpack.c.l.b16 %v1107
        %v1147 = vunpack.c.l.b16 %v1108
        %v1148 = vunpack.c.l.b16 %v1109
        %v1149 = vunpack.c.l.b16 %v1110
        %v1150 = vunpack.c.l.b16 %v1111
        %v1151 = vpack.c.b16 %v1136, %v1135
        %v1152 = vpack.c.b16 %v1138, %v1137
        %v1153 = vpack.c.b16 %v1140, %v1139
        %v1154 = vpack.c.b16 %v1142, %v1141
        %v1155 = vpack.c.b16 %v1144, %v1143
        %v1156 = vpack.c.b16 %v1146, %v1145
        %v1157 = vpack.c.b16 %v1148, %v1147
        %v1158 = vpack.c.b16 %v1150, %v1149
        %1167 = vmatprep.subr.bf16.mxu0 0
        %1168 = vmatpush1.bf16.msra.mxu0 %v1151
        %1169 = vmatprep.subr.bf16.mxu0 0
        %1170 = vmatpush1.bf16.msra.mxu0 %v1152
        %1171 = vmatprep.subr.bf16.mxu0 0
        %1172 = vmatpush1.bf16.msra.mxu0 %v1153
        %1173 = vmatprep.subr.bf16.mxu0 0
        %1174 = vmatpush1.bf16.msra.mxu0 %v1154
        %1175 = vmatprep.subr.bf16.mxu0 0
        %1176 = vmatpush1.bf16.msra.mxu0 %v1155
        %1177 = vmatprep.subr.bf16.mxu0 0
        %1178 = vmatpush1.bf16.msra.mxu0 %v1156
        %1179 = vmatprep.subr.bf16.mxu0 0
        %1180 = vmatpush1.bf16.msra.mxu0 %v1157
        %1181 = vmatprep.subr.bf16.mxu0 0
        %1182 = vmatpush1.bf16.msra.mxu0 %v1158
        %1183 = vmatprep.subr.bf16.mxu0 0
        %1184 = vmatpush1.bf16.msra.mxu0 0
        %1185 = vmatprep.subr.bf16.mxu0 0
        %1186 = vmatpush1.bf16.msra.mxu0 0
        %1187 = vmatprep.subr.bf16.mxu0 0
        %1188 = vmatpush1.bf16.msra.mxu0 0
        %1189 = vmatprep.subr.bf16.mxu0 0
        %1190 = vmatpush1.bf16.msra.mxu0 0
        %1191 = vmatprep.subr.bf16.mxu0 0
        %1192 = vmatpush1.bf16.msra.mxu0 0
        %1193 = vmatprep.subr.bf16.mxu0 0
        %1194 = vmatpush1.bf16.msra.mxu0 0
        %1195 = vmatprep.subr.bf16.mxu0 0
        %1196 = vmatpush1.bf16.msra.mxu0 0
        %1197 = vmatprep.subr.bf16.mxu0 0
        %1198 = vmatpush1.bf16.msra.mxu0 0
        %1199 = vmatprep.mubr.bf16.mxu0 0
        %1200 = vmatmul.mubr.bf16.gmra.mrb[0].mxu0 %v1095
        %v1201 = vpop.f32.mrb[0].mxu0
        %v1202 = vadd.f32 %v1117, %v1201
        %v1203 = vpop.f32.mrb[0].mxu0
        %v1204 = vpop.f32.mrb[0].mxu0
        %v1205 = vpop.f32.mrb[0].mxu0
        %1206 = vdwg.mxu0
        %v1207 = vadd.f32 %v1202, %v671
        %v1208 = vpack.c.bf16 %v1207, %v1207
        %v1209 = vld [vmem:[%s555] sm:$0xf]
        %v1210 = vld [vmem:[%s555 + $0x4] sm:$0xf]
        %v1211 = vld [vmem:[%s555 + $0x8] sm:$0xf]
        %v1212 = vld [vmem:[%s555 + $0xc] sm:$0xf]
        %v1213 = vld [vmem:[%s555 + $0x10] sm:$0xf]
        %v1214 = vld [vmem:[%s555 + $0x14] sm:$0xf]
        %v1215 = vld [vmem:[%s555 + $0x18] sm:$0xf]
        %v1216 = vld [vmem:[%s555 + $0x1c] sm:$0xf]
        %v1217 = vld [vmem:[%s555 + $0x20] sm:$0xf]
        %v1218 = vld [vmem:[%s555 + $0x24] sm:$0xf]
        %v1219 = vld [vmem:[%s555 + $0x28] sm:$0xf]
        %v1220 = vld [vmem:[%s555 + $0x2c] sm:$0xf]
        %v1221 = vld [vmem:[%s555 + $0x30] sm:$0xf]
        %v1222 = vld [vmem:[%s555 + $0x34] sm:$0xf]
        %v1223 = vld [vmem:[%s555 + $0x38] sm:$0xf]
        %v1224 = vld [vmem:[%s555 + $0x3c] sm:$0xf]
        %v1225 = vld [vmem:[%s3] sm:$0x1]
        %v1227 = vlaneseq
        %v1228 = vshrl.u32 %v1227, 7
        %v1229 = vsub.s32 0, %v1228
        %v1230 = vrot.slane %v1225, %v1229
        %v1248 = vunpack.c.l.b16 %v1209
        %v1249 = vunpack.c.l.b16 %v1210
        %v1250 = vunpack.c.l.b16 %v1211
        %v1251 = vunpack.c.l.b16 %v1212
        %v1252 = vunpack.c.l.b16 %v1213
        %v1253 = vunpack.c.l.b16 %v1214
        %v1254 = vunpack.c.l.b16 %v1215
        %v1255 = vunpack.c.l.b16 %v1216
        %v1256 = vunpack.c.l.b16 %v1217
        %v1257 = vunpack.c.l.b16 %v1218
        %v1258 = vunpack.c.l.b16 %v1219
        %v1259 = vunpack.c.l.b16 %v1220
        %v1260 = vunpack.c.l.b16 %v1221
        %v1261 = vunpack.c.l.b16 %v1222
        %v1262 = vunpack.c.l.b16 %v1223
        %v1263 = vunpack.c.l.b16 %v1224
        %v1264 = vpack.c.b16 %v1249, %v1248
        %v1265 = vpack.c.b16 %v1251, %v1250
        %v1266 = vpack.c.b16 %v1253, %v1252
        %v1267 = vpack.c.b16 %v1255, %v1254
        %v1268 = vpack.c.b16 %v1257, %v1256
        %v1269 = vpack.c.b16 %v1259, %v1258
        %v1270 = vpack.c.b16 %v1261, %v1260
        %v1271 = vpack.c.b16 %v1263, %v1262
        %1280 = vmatprep.subr.bf16.mxu0 0
        %1281 = vmatpush1.bf16.msra.mxu0 %v1264
        %1282 = vmatprep.subr.bf16.mxu0 0
        %1283 = vmatpush1.bf16.msra.mxu0 %v1265
        %1284 = vmatprep.subr.bf16.mxu0 0
        %1285 = vmatpush1.bf16.msra.mxu0 %v1266
        %1286 = vmatprep.subr.bf16.mxu0 0
        %1287 = vmatpush1.bf16.msra.mxu0 %v1267
        %1288 = vmatprep.subr.bf16.mxu0 0
        %1289 = vmatpush1.bf16.msra.mxu0 %v1268
        %1290 = vmatprep.subr.bf16.mxu0 0
        %1291 = vmatpush1.bf16.msra.mxu0 %v1269
        %1292 = vmatprep.subr.bf16.mxu0 0
        %1293 = vmatpush1.bf16.msra.mxu0 %v1270
        %1294 = vmatprep.subr.bf16.mxu0 0
        %1295 = vmatpush1.bf16.msra.mxu0 %v1271
        %1296 = vmatprep.subr.bf16.mxu0 0
        %1297 = vmatpush1.bf16.msra.mxu0 0
        %1298 = vmatprep.subr.bf16.mxu0 0
        %1299 = vmatpush1.bf16.msra.mxu0 0
        %1300 = vmatprep.subr.bf16.mxu0 0
        %1301 = vmatpush1.bf16.msra.mxu0 0
        %1302 = vmatprep.subr.bf16.mxu0 0
        %1303 = vmatpush1.bf16.msra.mxu0 0
        %1304 = vmatprep.subr.bf16.mxu0 0
        %1305 = vmatpush1.bf16.msra.mxu0 0
        %1306 = vmatprep.subr.bf16.mxu0 0
        %1307 = vmatpush1.bf16.msra.mxu0 0
        %1308 = vmatprep.subr.bf16.mxu0 0
        %1309 = vmatpush1.bf16.msra.mxu0 0
        %1310 = vmatprep.subr.bf16.mxu0 0
        %1311 = vmatpush1.bf16.msra.mxu0 0
        %1312 = vmatprep.mubr.bf16.mxu0 0
        %1313 = vmatmul.mubr.bf16.gmra.mrb[0].mxu0 %v1208
        %v1314 = vpop.f32.mrb[0].mxu0
        %v1315 = vadd.f32 %v1230, %v1314
        %v1316 = vpop.f32.mrb[0].mxu0
        %v1317 = vpop.f32.mrb[0].mxu0
        %v1318 = vpop.f32.mrb[0].mxu0
        %1319 = vdwg.mxu0
        %1320 = vmax.xlane.f32.xlu0 %v1315
        %v1321 = vpop.xlane.xlu0 %1320
        %v1322 = vsub.f32 %v1315, %v1321
        %v1323 = vmul.f32 %v1322, 1.442695
        %v1324 = vpow.pop %v1323
        %1325 = vadd.xlane.f32.xlu0 %v1324
        %v1326 = vpop.xlane.xlu0 %1325
        %v1327 = vrcp.pop %v1326
        %v1328 = vmul.f32 %v1324, %v1327
        %v1329 = vpack.c.bf16 %v1328, %v1328
        %v1330 = vld [vmem:[%s564] sm:$0xf]
        %v1331 = vld [vmem:[%s564 + $0x4] sm:$0xf]
        %v1332 = vld [vmem:[%s564 + $0x8] sm:$0xf]
        %v1333 = vld [vmem:[%s564 + $0xc] sm:$0xf]
        %v1334 = vld [vmem:[%s564 + $0x10] sm:$0xf]
        %v1335 = vld [vmem:[%s564 + $0x14] sm:$0xf]
        %v1336 = vld [vmem:[%s564 + $0x18] sm:$0xf]
        %v1337 = vld [vmem:[%s564 + $0x1c] sm:$0xf]
        %v1338 = vld [vmem:[%s564 + $0x20] sm:$0xf]
        %v1339 = vld [vmem:[%s564 + $0x24] sm:$0xf]
        %v1340 = vld [vmem:[%s564 + $0x28] sm:$0xf]
        %v1341 = vld [vmem:[%s564 + $0x2c] sm:$0xf]
        %v1342 = vld [vmem:[%s564 + $0x30] sm:$0xf]
        %v1343 = vld [vmem:[%s564 + $0x34] sm:$0xf]
        %v1344 = vld [vmem:[%s564 + $0x38] sm:$0xf]
        %v1345 = vld [vmem:[%s564 + $0x3c] sm:$0xf]
        %v1362 = vunpack.c.l.b16 %v1330
        %v1363 = vunpack.c.l.b16 %v1331
        %v1364 = vunpack.c.l.b16 %v1332
        %v1365 = vunpack.c.l.b16 %v1333
        %v1366 = vunpack.c.l.b16 %v1334
        %v1367 = vunpack.c.l.b16 %v1335
        %v1368 = vunpack.c.l.b16 %v1336
        %v1369 = vunpack.c.l.b16 %v1337
        %v1370 = vunpack.c.l.b16 %v1338
        %v1371 = vunpack.c.l.b16 %v1339
        %v1372 = vunpack.c.l.b16 %v1340
        %v1373 = vunpack.c.l.b16 %v1341
        %v1374 = vunpack.c.l.b16 %v1342
        %v1375 = vunpack.c.l.b16 %v1343
        %v1376 = vunpack.c.l.b16 %v1344
        %v1377 = vunpack.c.l.b16 %v1345
        %v1378 = vpack.c.b16 %v1363, %v1362
        %v1379 = vpack.c.b16 %v1365, %v1364
        %v1380 = vpack.c.b16 %v1367, %v1366
        %v1381 = vpack.c.b16 %v1369, %v1368
        %v1382 = vpack.c.b16 %v1371, %v1370
        %v1383 = vpack.c.b16 %v1373, %v1372
        %v1384 = vpack.c.b16 %v1375, %v1374
        %v1385 = vpack.c.b16 %v1377, %v1376
        %1394 = vmatprep.subr.bf16.mxu0 0
        %1395 = vmatpush1.bf16.msra.mxu0 %v1378
        %1396 = vmatprep.subr.bf16.mxu0 0
        %1397 = vmatpush1.bf16.msra.mxu0 %v1379
        %1398 = vmatprep.subr.bf16.mxu0 0
        %1399 = vmatpush1.bf16.msra.mxu0 %v1380
        %1400 = vmatprep.subr.bf16.mxu0 0
        %1401 = vmatpush1.bf16.msra.mxu0 %v1381
        %1402 = vmatprep.subr.bf16.mxu0 0
        %1403 = vmatpush1.bf16.msra.mxu0 %v1382
        %1404 = vmatprep.subr.bf16.mxu0 0
        %1405 = vmatpush1.bf16.msra.mxu0 %v1383
        %1406 = vmatprep.subr.bf16.mxu0 0
        %1407 = vmatpush1.bf16.msra.mxu0 %v1384
        %1408 = vmatprep.subr.bf16.mxu0 0
        %1409 = vmatpush1.bf16.msra.mxu0 %v1385
        %1410 = vmatprep.subr.bf16.mxu0 0
        %1411 = vmatpush1.bf16.msra.mxu0 0
        %1412 = vmatprep.subr.bf16.mxu0 0
        %1413 = vmatpush1.bf16.msra.mxu0 0
        %1414 = vmatprep.subr.bf16.mxu0 0
        %1415 = vmatpush1.bf16.msra.mxu0 0
        %1416 = vmatprep.subr.bf16.mxu0 0
        %1417 = vmatpush1.bf16.msra.mxu0 0
        %1418 = vmatprep.subr.bf16.mxu0 0
        %1419 = vmatpush1.bf16.msra.mxu0 0
        %1420 = vmatprep.subr.bf16.mxu0 0
        %1421 = vmatpush1.bf16.msra.mxu0 0
        %1422 = vmatprep.subr.bf16.mxu0 0
        %1423 = vmatpush1.bf16.msra.mxu0 0
        %1424 = vmatprep.subr.bf16.mxu0 0
        %1425 = vmatpush1.bf16.msra.mxu0 0
        %1426 = vmatprep.mubr.bf16.mxu0 0
        %1427 = vmatmul.mubr.bf16.gmra.mrb[0].mxu0 %v1329
        %v1428 = vpop.f32.mrb[0].mxu0
        %v1429 = vadd.f32 0.0, %v1428
        %v1430 = vpop.f32.mrb[0].mxu0
        %v1431 = vpop.f32.mrb[0].mxu0
        %v1432 = vpop.f32.mrb[0].mxu0
        %1433 = vdwg.mxu0
        %v1434 = vpack.c.bf16 %v1429, %v1429
        %v1435 = vld [vmem:[#allocation12] sm:$0xf]
        %v1436 = vld [vmem:[#allocation12 + $0x4] sm:$0xf]
        %v1437 = vld [vmem:[#allocation12 + $0x8] sm:$0xf]
        %v1438 = vld [vmem:[#allocation12 + $0xc] sm:$0xf]
        %v1439 = vld [vmem:[#allocation12 + $0x10] sm:$0xf]
        %v1440 = vld [vmem:[#allocation12 + $0x14] sm:$0xf]
        %v1441 = vld [vmem:[#allocation12 + $0x18] sm:$0xf]
        %v1442 = vld [vmem:[#allocation12 + $0x1c] sm:$0xf]
        %v1443 = vld [vmem:[#allocation12 + $0x20] sm:$0xf]
        %v1444 = vld [vmem:[#allocation12 + $0x24] sm:$0xf]
        %v1445 = vld [vmem:[#allocation12 + $0x28] sm:$0xf]
        %v1446 = vld [vmem:[#allocation12 + $0x2c] sm:$0xf]
        %v1447 = vld [vmem:[#allocation12 + $0x30] sm:$0xf]
        %v1448 = vld [vmem:[#allocation12 + $0x34] sm:$0xf]
        %v1449 = vld [vmem:[#allocation12 + $0x38] sm:$0xf]
        %v1450 = vld [vmem:[#allocation12 + $0x3c] sm:$0xf]
        %v1451 = vld [vmem:[%s9] sm:$0x1]
        %v1453 = vlaneseq
        %v1454 = vshrl.u32 %v1453, 7
        %v1455 = vsub.s32 0, %v1454
        %v1456 = vrot.slane %v1451, %v1455
        %v1474 = vunpack.c.l.b16 %v1435
        %v1475 = vunpack.c.l.b16 %v1436
        %v1476 = vunpack.c.l.b16 %v1437
        %v1477 = vunpack.c.l.b16 %v1438
        %v1478 = vunpack.c.l.b16 %v1439
        %v1479 = vunpack.c.l.b16 %v1440
        %v1480 = vunpack.c.l.b16 %v1441
        %v1481 = vunpack.c.l.b16 %v1442
        %v1482 = vunpack.c.l.b16 %v1443
        %v1483 = vunpack.c.l.b16 %v1444
        %v1484 = vunpack.c.l.b16 %v1445
        %v1485 = vunpack.c.l.b16 %v1446
        %v1486 = vunpack.c.l.b16 %v1447
        %v1487 = vunpack.c.l.b16 %v1448
        %v1488 = vunpack.c.l.b16 %v1449
        %v1489 = vunpack.c.l.b16 %v1450
        %v1490 = vpack.c.b16 %v1475, %v1474
        %v1491 = vpack.c.b16 %v1477, %v1476
        %v1492 = vpack.c.b16 %v1479, %v1478
        %v1493 = vpack.c.b16 %v1481, %v1480
        %v1494 = vpack.c.b16 %v1483, %v1482
        %v1495 = vpack.c.b16 %v1485, %v1484
        %v1496 = vpack.c.b16 %v1487, %v1486
        %v1497 = vpack.c.b16 %v1489, %v1488
        %1506 = vmatprep.subr.bf16.mxu0 0
        %1507 = vmatpush1.bf16.msra.mxu0 %v1490
        %1508 = vmatprep.subr.bf16.mxu0 0
        %1509 = vmatpush1.bf16.msra.mxu0 %v1491
        %1510 = vmatprep.subr.bf16.mxu0 0
        %1511 = vmatpush1.bf16.msra.mxu0 %v1492
        %1512 = vmatprep.subr.bf16.mxu0 0
        %1513 = vmatpush1.bf16.msra.mxu0 %v1493
        %1514 = vmatprep.subr.bf16.mxu0 0
        %1515 = vmatpush1.bf16.msra.mxu0 %v1494
        %1516 = vmatprep.subr.bf16.mxu0 0
        %1517 = vmatpush1.bf16.msra.mxu0 %v1495
        %1518 = vmatprep.subr.bf16.mxu0 0
        %1519 = vmatpush1.bf16.msra.mxu0 %v1496
        %1520 = vmatprep.subr.bf16.mxu0 0
        %1521 = vmatpush1.bf16.msra.mxu0 %v1497
        %1522 = vmatprep.subr.bf16.mxu0 0
        %1523 = vmatpush1.bf16.msra.mxu0 0
        %1524 = vmatprep.subr.bf16.mxu0 0
        %1525 = vmatpush1.bf16.msra.mxu0 0
        %1526 = vmatprep.subr.bf16.mxu0 0
        %1527 = vmatpush1.bf16.msra.mxu0 0
        %1528 = vmatprep.subr.bf16.mxu0 0
        %1529 = vmatpush1.bf16.msra.mxu0 0
        %1530 = vmatprep.subr.bf16.mxu0 0
        %1531 = vmatpush1.bf16.msra.mxu0 0
        %1532 = vmatprep.subr.bf16.mxu0 0
        %1533 = vmatpush1.bf16.msra.mxu0 0
        %1534 = vmatprep.subr.bf16.mxu0 0
        %1535 = vmatpush1.bf16.msra.mxu0 0
        %1536 = vmatprep.subr.bf16.mxu0 0
        %1537 = vmatpush1.bf16.msra.mxu0 0
        %1538 = vmatprep.mubr.bf16.mxu0 0
        %1539 = vmatmul.mubr.bf16.gmra.mrb[0].mxu0 %v1434
        %v1540 = vpop.f32.mrb[0].mxu0
        %v1541 = vadd.f32 %v1456, %v1540
        %v1542 = vpop.f32.mrb[0].mxu0
        %v1543 = vpop.f32.mrb[0].mxu0
        %v1544 = vpop.f32.mrb[0].mxu0
        %1545 = vdwg.mxu0
        %v1546 = vadd.f32 %v1094, %v1541
        %v1547 = vpack.c.bf16 %v1546, %v1546
        %v1548 = vld [vmem:[#allocation14] sm:$0xf]
        %v1549 = vld [vmem:[#allocation14 + $0x4] sm:$0xf]
        %v1550 = vld [vmem:[#allocation14 + $0x8] sm:$0xf]
        %v1551 = vld [vmem:[#allocation14 + $0xc] sm:$0xf]
        %v1552 = vld [vmem:[#allocation14 + $0x10] sm:$0xf]
        %v1553 = vld [vmem:[#allocation14 + $0x14] sm:$0xf]
        %v1554 = vld [vmem:[#allocation14 + $0x18] sm:$0xf]
        %v1555 = vld [vmem:[#allocation14 + $0x1c] sm:$0xf]
        %v1556 = vld [vmem:[#allocation14 + $0x20] sm:$0xf]
        %v1557 = vld [vmem:[#allocation14 + $0x24] sm:$0xf]
        %v1558 = vld [vmem:[#allocation14 + $0x28] sm:$0xf]
        %v1559 = vld [vmem:[#allocation14 + $0x2c] sm:$0xf]
        %v1560 = vld [vmem:[#allocation14 + $0x30] sm:$0xf]
        %v1561 = vld [vmem:[#allocation14 + $0x34] sm:$0xf]
        %v1562 = vld [vmem:[#allocation14 + $0x38] sm:$0xf]
        %v1563 = vld [vmem:[#allocation14 + $0x3c] sm:$0xf]
        %v1564 = vld [vmem:[%s11] sm:$0x1]
        %v1566 = vlaneseq
        %v1567 = vshrl.u32 %v1566, 7
        %v1568 = vsub.s32 0, %v1567
        %v1569 = vrot.slane %v1564, %v1568
        %v1587 = vunpack.c.l.b16 %v1548
        %v1588 = vunpack.c.l.b16 %v1549
        %v1589 = vunpack.c.l.b16 %v1550
        %v1590 = vunpack.c.l.b16 %v1551
        %v1591 = vunpack.c.l.b16 %v1552
        %v1592 = vunpack.c.l.b16 %v1553
        %v1593 = vunpack.c.l.b16 %v1554
        %v1594 = vunpack.c.l.b16 %v1555
        %v1595 = vunpack.c.l.b16 %v1556
        %v1596 = vunpack.c.l.b16 %v1557
        %v1597 = vunpack.c.l.b16 %v1558
        %v1598 = vunpack.c.l.b16 %v1559
        %v1599 = vunpack.c.l.b16 %v1560
        %v1600 = vunpack.c.l.b16 %v1561
        %v1601 = vunpack.c.l.b16 %v1562
        %v1602 = vunpack.c.l.b16 %v1563
        %v1603 = vpack.c.b16 %v1588, %v1587
        %v1604 = vpack.c.b16 %v1590, %v1589
        %v1605 = vpack.c.b16 %v1592, %v1591
        %v1606 = vpack.c.b16 %v1594, %v1593
        %v1607 = vpack.c.b16 %v1596, %v1595
        %v1608 = vpack.c.b16 %v1598, %v1597
        %v1609 = vpack.c.b16 %v1600, %v1599
        %v1610 = vpack.c.b16 %v1602, %v1601
        %1619 = vmatprep.subr.bf16.mxu0 0
        %1620 = vmatpush1.bf16.msra.mxu0 %v1603
        %1621 = vmatprep.subr.bf16.mxu0 0
        %1622 = vmatpush1.bf16.msra.mxu0 %v1604
        %1623 = vmatprep.subr.bf16.mxu0 0
        %1624 = vmatpush1.bf16.msra.mxu0 %v1605
        %1625 = vmatprep.subr.bf16.mxu0 0
        %1626 = vmatpush1.bf16.msra.mxu0 %v1606
        %1627 = vmatprep.subr.bf16.mxu0 0
        %1628 = vmatpush1.bf16.msra.mxu0 %v1607
        %1629 = vmatprep.subr.bf16.mxu0 0
        %1630 = vmatpush1.bf16.msra.mxu0 %v1608
        %1631 = vmatprep.subr.bf16.mxu0 0
        %1632 = vmatpush1.bf16.msra.mxu0 %v1609
        %1633 = vmatprep.subr.bf16.mxu0 0
        %1634 = vmatpush1.bf16.msra.mxu0 %v1610
        %1635 = vmatprep.subr.bf16.mxu0 0
        %1636 = vmatpush1.bf16.msra.mxu0 0
        %1637 = vmatprep.subr.bf16.mxu0 0
        %1638 = vmatpush1.bf16.msra.mxu0 0
        %1639 = vmatprep.subr.bf16.mxu0 0
        %1640 = vmatpush1.bf16.msra.mxu0 0
        %1641 = vmatprep.subr.bf16.mxu0 0
        %1642 = vmatpush1.bf16.msra.mxu0 0
        %1643 = vmatprep.subr.bf16.mxu0 0
        %1644 = vmatpush1.bf16.msra.mxu0 0
        %1645 = vmatprep.subr.bf16.mxu0 0
        %1646 = vmatpush1.bf16.msra.mxu0 0
        %1647 = vmatprep.subr.bf16.mxu0 0
        %1648 = vmatpush1.bf16.msra.mxu0 0
        %1649 = vmatprep.subr.bf16.mxu0 0
        %1650 = vmatpush1.bf16.msra.mxu0 0
        %1651 = vmatprep.mubr.bf16.mxu0 0
        %1652 = vmatmul.mubr.bf16.gmra.mrb[0].mxu0 %v1547
        %v1653 = vpop.f32.mrb[0].mxu0
        %v1654 = vadd.f32 %v1569, %v1653
        %v1655 = vpop.f32.mrb[0].mxu0
        %v1656 = vpop.f32.mrb[0].mxu0
        %v1657 = vpop.f32.mrb[0].mxu0
        %1658 = vdwg.mxu0
        %v1659 = vadd.f32 %v1654, %v671
        %1660 = vst [vmem:[%s644] sm:$0xff] %v1659
        %p1661 = scmp.eq.s32.totalorder %s46, 1
        // Predicated region
        $region101: #{tpu_custom_call.1} parent=67 // pred_check
          %p1662 = pneg %p1661
        $region102: #{tpu_custom_call.1} parent=67 // pred_check_branch
          %1664 = sbr.rel (%p1662) target = $region104
        $region103: #{tpu_custom_call.1} parent=67 // pred_region
          %1665 = vst [vmem:[%s651] sm:$0xff] %v1328
        $region104: #{tpu_custom_call.1} parent=67 // pred_fallthru
          _
        %s1666 = sand.u32 %s338, 1
        %s1667 = scalar_lea.sflag [#allocation5], %s1666
        %s1668 = sand.u32 %s338, 1
        %s1669 = smul.addr %s1668, 8
        %s1670 = scalar_lea.vmem [#allocation15], %s1669
        %s1671 = sand.u32 %s364, 1
        %s1672 = scalar_lea.sflag [#allocation17], %s1671
        %s1673 = sand.u32 %s364, 1
        %s1674 = smul.addr %s1673, 8
        %s1675 = scalar_lea.vmem [#allocation16], %s1674
        // Predicated region
        $region105: #{tpu_custom_call.1} parent=67 // pred_check
          %p1676 = pneg %p348
        $region106: #{tpu_custom_call.1} parent=67 // pred_check_branch
          %1678 = sbr.rel (%p1676) target = $region108
        $region107: #{tpu_custom_call.1} parent=67 // pred_region
          %s1680 = ssub.s32 128, 128
          %1681 = vsyncadd %s1667, %s1680
          %s1682 = smul.addr %s45, 128
          %s1683 = scalar_lea.hbm %s12, %s1682
          %s1685 = sshll.u32 %s1670, 4
          %s1686 = int_to_ptr.vmem [resolvable:$true] %s1685
          %1688 = dma.vmem_to_hbm [thread:$0]  %s1686, 128, %s1683, %s1667
        $region108: #{tpu_custom_call.1} parent=67 // pred_fallthru
          _
        // Predicated region
        $region109: #{tpu_custom_call.1} parent=67 // pred_check
          %p1689 = pneg %p374
        $region110: #{tpu_custom_call.1} parent=67 // pred_check_branch
          %1691 = sbr.rel (%p1689) target = $region112
        $region111: #{tpu_custom_call.1} parent=67 // pred_region
          %s1693 = ssub.s32 128, 128
          %1694 = vsyncadd %s1672, %s1693
          %s1695 = smul.addr %s45, 128
          %s1696 = scalar_lea.hbm %s13, %s1695
          %s1698 = sshll.u32 %s1675, 4
          %s1699 = int_to_ptr.vmem [resolvable:$true] %s1698
          %1701 = dma.vmem_to_hbm [thread:$0]  %s1699, 128, %s1696, %s1672
        $region112: #{tpu_custom_call.1} parent=67 // pred_fallthru
          _
      $region68: #{tpu_custom_call.1} parent=5 // pred_fallthru
        _
      %p1702 = scmp.le.s32.totalorder 2, %s36
      // Predicated region
      $region113: #{tpu_custom_call.1} parent=5 // pred_check
        %p1703 = pneg %p1702
      $region114: #{tpu_custom_call.1} parent=5 // pred_check_branch
        %1705 = sbr.rel (%p1703) target = $region116
      $region115: #{tpu_custom_call.1} parent=5 // pred_region
        %s1706 = ssub.s32 %s36, 2
        // Predicated region
        $region117: #{tpu_custom_call.1} parent=115 // pred_check
          %p1707 = pneg %p354
        $region118: #{tpu_custom_call.1} parent=115 // pred_check_branch
          %1709 = sbr.rel (%p1707) target = $region120
        $region119: #{tpu_custom_call.1} parent=115 // pred_region
          %s1710 = sand.u32 %s339, 1
          %s1711 = scalar_lea.sflag [#allocation5], %s1710
          %s1712 = sand.u32 %s339, 1
          %s1713 = smul.addr %s1712, 8
          %s1714 = scalar_lea.vmem [#allocation15], %s1713
          %1715 = dma.done %s1711, 128
        $region120: #{tpu_custom_call.1} parent=115 // pred_fallthru
          _
        // Predicated region
        $region121: #{tpu_custom_call.1} parent=115 // pred_check
          %p1716 = pneg %p380
        $region122: #{tpu_custom_call.1} parent=115 // pred_check_branch
          %1718 = sbr.rel (%p1716) target = $region124
        $region123: #{tpu_custom_call.1} parent=115 // pred_region
          %s1719 = sand.u32 %s365, 1
          %s1720 = scalar_lea.sflag [#allocation17], %s1719
          %s1721 = sand.u32 %s365, 1
          %s1722 = smul.addr %s1721, 8
          %s1723 = scalar_lea.vmem [#allocation16], %s1722
          %1724 = dma.done %s1720, 128
        $region124: #{tpu_custom_call.1} parent=115 // pred_fallthru
          _
      $region116: #{tpu_custom_call.1} parent=5 // pred_fallthru
        _
    $region6: #{tpu_custom_call.1} parent=1 // loop_footer
      %s40 = sadd.s32 1, %s36
    $region7: #{tpu_custom_call.1} parent=1 // loop_footer_branch
      %35 = sbr.rel target = $region3
    $region8: #{tpu_custom_call.1} parent=1 // loop_exit
      _
    %1725 = vsyncpa [#allocation4], 1
    %s1726 = scalar_lea.sflag [#allocation4], 1
    %1727 = vsyncpa %s1726, 1
    %1728 = vsyncpa [#allocation7], 1
    %s1729 = scalar_lea.sflag [#allocation7], 1
    %1730 = vsyncpa %s1729, 1
    %1731 = vsyncpa [#allocation10], 1
    %s1732 = scalar_lea.sflag [#allocation10], 1
    %1733 = vsyncpa %s1732, 1
    %1734 = vsyncpa [#allocation13], 1
    %1735 = vsyncpa [#allocation5], 1
    %s1736 = scalar_lea.sflag [#allocation5], 1
    %1737 = vsyncpa %s1736, 1
    %1738 = vsyncpa [#allocation17], 1
    %s1739 = scalar_lea.sflag [#allocation17], 1
    %1740 = vsyncpa %s1739, 1

</llo_original>
